<compile_context>
chip_gen: v6e
topology: v6e:2x2x1
jax: 0.10.0
libtpu: 0.0.40
codegen_flags: <defaults>
</compile_context>

<pallas_src>
import jax
import jax.numpy as jnp
from jax import lax
from jax.experimental import pallas as pl
from jax.experimental.pallas import tpu as pltpu


# ----------------------------- Pallas kernel --------------------------------
def _lstm_chunk_kernel(x_ref, wih_ref, whh_ref, b_ref, wlin_ref, blin_ref,
                       out_ref, states_ref,
                       xg_scr, hs_scr, h_scr, c_scr):
    """One time-chunk of a single-layer LSTM + Linear + residual.

    Grid: (num_chunks,) over the time axis, sequential ("arbitrary").

    x_ref:      (chunk_T, B)      f32  time-major input chunk (in_channels == 1)
    wih_ref:    (1, 4H)           f32  W_ih^T   (PyTorch gate order i, f, g, o)
    whh_ref:    (H, 4H)           f32  W_hh^T
    b_ref:      (1, 4H)           f32  b_ih + b_hh
    wlin_ref:   (1, H)            f32  output Linear weight (out_channels == 1)
    blin_ref:   (1, 1)            f32  output Linear bias
    out_ref:    (B, chunk_T)      f32  linear output (+ residual), batch-major
    states_ref: (B, chunk_T, H)   f32  hidden states, batch-major
    xg_scr:     (chunk_T, B, 4H)  f32  precomputed input-gate contribution
    hs_scr:     (chunk_T, B, H)   f32  per-chunk hidden states (time-major)
    h_scr:      (B, H)            f32  hidden carry (persists across chunks)
    c_scr:      (B, H)            f32  cell   carry (persists across chunks)
    """
    chunk_T, B = x_ref.shape
    H = whh_ref.shape[0]

    # Zero initial state at the first chunk only (state=None in the module).
    @pl.when(pl.program_id(0) == 0)
    def _():
        h_scr[...] = jnp.zeros_like(h_scr)
        c_scr[...] = jnp.zeros_like(c_scr)

    # Input-gate contribution for the whole chunk, computed once outside the
    # recurrent loop:  xg[t, b, :] = x[t, b] * W_ih_row + (b_ih + b_hh).
    xg_scr[...] = (x_ref[...][:, :, None] * wih_ref[...][None, :, :]
                   + b_ref[...][None, :, :])

    whh = whh_ref[...]                                   # (H, 4H), loop-invariant

    def step(t, carry):
        h, c = carry
        # gates = (x_t W_ih^T + b) + h W_hh^T           -> (B, 4H)
        gates = xg_scr[t] + jnp.dot(h, whh, preferred_element_type=jnp.float32)

        i = jax.nn.sigmoid(gates[:, 0 * H:1 * H])
        f = jax.nn.sigmoid(gates[:, 1 * H:2 * H])
        g = jnp.tanh(gates[:, 2 * H:3 * H])
        o = jax.nn.sigmoid(gates[:, 3 * H:4 * H])

        c_new = f * c + i * g
        h_new = o * jnp.tanh(c_new)

        hs_scr[t] = h_new                                # dynamic leading-axis store
        return (h_new, c_new)

    h_fin, c_fin = lax.fori_loop(0, chunk_T, step, (h_scr[...], c_scr[...]),
                                 unroll=min(8, chunk_T))
    h_scr[...] = h_fin
    c_scr[...] = c_fin

    # Per-chunk epilogue (hoisted out of the recurrence): batch-major writeback
    # of the hidden states + Linear(H -> 1) + residual, lane-dense along T.
    wlin = wlin_ref[...]                                 # (1, H)
    blin = blin_ref[0, 0]
    for b in range(B):                                   # B is small and static
        hs_b = hs_scr[:, b, :]                           # (chunk_T, H) static slice
        states_ref[b] = hs_b
        y_b = jnp.sum(hs_b * wlin, axis=-1)              # (chunk_T,)
        # residual: x[..., 0] with in_channels == 1 is just x itself
        out_ref[b] = y_b + blin + x_ref[:, b]


def _choose_chunk_t(T, B, H, vmem_budget_bytes=8 << 20):
    """Pick a time-chunk length: the biggest per-chunk buffer is the xg scratch
    (chunk_T * B * 4H * 4 bytes). Chunk must divide T and be a multiple of 128
    (lane width) unless it equals T, to keep BlockSpecs legal and lane-dense."""
    cap = max(128, vmem_budget_bytes // (B * 4 * H * 4))
    if T <= cap:
        return T
    c = (cap // 128) * 128
    while c >= 128:
        if T % c == 0:
            return c
        c -= 128
    # TODO(synk): pad T to a multiple of 128 for ragged long sequences.
    return T


# ------------------------------ wrapper --------------------------------------
@jax.jit
def audio_rnn_forward(x2d, w_ih, w_hh, b_ih, b_hh, w_lin, b_lin):
    """Mirrors AudioRNN.forward for a 2-D (B, T) input, LSTM cell, state=None.

    Returns (out, states) with out: (B, T), states: (B, T, H).
    """
    B, T = x2d.shape
    H = w_hh.shape[1]
    chunk_T = _choose_chunk_t(T, B, H)
    assert T % chunk_T == 0, "T must be divisible by the chosen time chunk"
    num_chunks = T // chunk_T

    # Glue / parameter reshaping stays in plain JAX.  Only the (B, T) input is
    # transposed (tiny vs. the (B, T, H) states array, which is written
    # batch-major directly by the kernel).
    x_tm = jnp.transpose(x2d).astype(jnp.float32)                # (T, B)
    wih_row = jnp.transpose(w_ih).astype(jnp.float32)            # (1, 4H)
    whh_t = jnp.transpose(w_hh).astype(jnp.float32)              # (H, 4H)
    b_row = (b_ih + b_hh)[None, :].astype(jnp.float32)           # (1, 4H)
    wlin_row = w_lin.astype(jnp.float32)                         # (1, H)
    blin = b_lin.reshape(1, 1).astype(jnp.float32)               # (1, 1)

    out, states = pl.pallas_call(
        _lstm_chunk_kernel,
        out_shape=(
            jax.ShapeDtypeStruct((B, T), jnp.float32),
            jax.ShapeDtypeStruct((B, T, H), jnp.float32),
        ),
        grid_spec=pltpu.PrefetchScalarGridSpec(
            num_scalar_prefetch=0,
            grid=(num_chunks,),
            in_specs=[
                pl.BlockSpec((chunk_T, B), lambda c: (c, 0)),      # x (time-major)
                pl.BlockSpec((1, 4 * H), lambda c: (0, 0)),        # W_ih^T
                pl.BlockSpec((H, 4 * H), lambda c: (0, 0)),        # W_hh^T
                pl.BlockSpec((1, 4 * H), lambda c: (0, 0)),        # bias
                pl.BlockSpec((1, H), lambda c: (0, 0)),            # W_lin
                pl.BlockSpec((1, 1), lambda c: (0, 0)),            # b_lin
            ],
            out_specs=(
                pl.BlockSpec((B, chunk_T), lambda c: (0, c)),      # out (lane-dense)
                pl.BlockSpec((B, chunk_T, H), lambda c: (0, c, 0)),  # states
            ),
            scratch_shapes=[
                pltpu.VMEM((chunk_T, B, 4 * H), jnp.float32),      # xg
                pltpu.VMEM((chunk_T, B, H), jnp.float32),          # hs (chunk)
                pltpu.VMEM((B, H), jnp.float32),                   # h carry
                pltpu.VMEM((B, H), jnp.float32),                   # c carry
            ],
        ),
        compiler_params=pltpu.CompilerParams(
            dimension_semantics=("arbitrary",),   # sequential: state carried in scratch
            vmem_limit_bytes=32 * 1024 * 1024,    # fits v5e/v6e/v7x scoped VMEM
        ),
    )(x_tm, wih_row, whh_t, b_row, wlin_row, blin)

    return out, states


# --------------------------- pure-JAX reference -------------------------------
def _ref_forward(x2d, w_ih, w_hh, b_ih, b_hh, w_lin, b_lin):
    B, T = x2d.shape
    H = w_hh.shape[1]
    x = x2d[:, :, None]                                          # (B, T, 1)

    def step(carry, x_t):
        h, c = carry
        gates = x_t @ w_ih.T + h @ w_hh.T + b_ih + b_hh
        i, f, g, o = jnp.split(gates, 4, axis=-1)
        i, f, o = jax.nn.sigmoid(i), jax.nn.sigmoid(f), jax.nn.sigmoid(o)
        g = jnp.tanh(g)
        c = f * c + i * g
        h = o * jnp.tanh(c)
        return (h, c), h

    init = (jnp.zeros((B, H), jnp.float32), jnp.zeros((B, H), jnp.float32))
    _, hs = lax.scan(step, init, jnp.transpose(x, (1, 0, 2)))
    states = jnp.transpose(hs, (1, 0, 2))                        # (B, T, H)
    out = states @ w_lin.T + b_lin                               # (B, T, 1)
    out = out + x[..., 0][..., None]                             # residual
    return out[..., 0], states


# ---------------------------------- main --------------------------------------
if __name__ == "__main__":
    B, T, H = 2, 8, 32
    in_ch, out_ch = 1, 1

    key = jax.random.PRNGKey(0)
    kx, k1, k2, k3, k4, k5, k6 = jax.random.split(key, 7)

    # Deterministic parameter init (PyTorch-style uniform(-1/sqrt(H), 1/sqrt(H))).
    bound = 1.0 / (H ** 0.5)
    w_ih = jax.random.uniform(k1, (4 * H, in_ch), jnp.float32, -bound, bound)
    w_hh = jax.random.uniform(k2, (4 * H, H), jnp.float32, -bound, bound)
    b_ih = jax.random.uniform(k3, (4 * H,), jnp.float32, -bound, bound)
    b_hh = jax.random.uniform(k4, (4 * H,), jnp.float32, -bound, bound)
    w_lin = jax.random.uniform(k5, (out_ch, H), jnp.float32, -bound, bound)
    b_lin = jax.random.uniform(k6, (out_ch,), jnp.float32, -bound, bound)

    # 2-D audio input (B, T) — exercises the unsqueeze / squeeze path.
    x = jax.random.normal(kx, (B, T), jnp.float32)

    out, states = audio_rnn_forward(x, w_ih, w_hh, b_ih, b_hh, w_lin, b_lin)
    out = jax.block_until_ready(out)
    states = jax.block_until_ready(states)

    out_ref, states_ref = _ref_forward(x, w_ih, w_hh, b_ih, b_hh, w_lin, b_lin)

    assert out.shape == (B, T) and states.shape == (B, T, H)
    assert jnp.allclose(out, out_ref, atol=1e-4, rtol=1e-4)
    assert jnp.allclose(states, states_ref, atol=1e-4, rtol=1e-4)

    print("KERNEL_OK")
</pallas_src>

<mosaic_0001>
module attributes {stable_mosaic.version = 11 : i64} {
  func.func @_lstm_chunk_kernel(%arg0: i32, %arg1: memref<8x2xf32, #tpu.memory_space<vmem>>, %arg2: memref<1x128xf32, #tpu.memory_space<vmem>>, %arg3: memref<32x128xf32, #tpu.memory_space<vmem>>, %arg4: memref<1x128xf32, #tpu.memory_space<vmem>>, %arg5: memref<1x32xf32, #tpu.memory_space<vmem>>, %arg6: memref<1x1xf32, #tpu.memory_space<vmem>>, %arg7: memref<2x8xf32, #tpu.memory_space<vmem>>, %arg8: memref<2x8x32xf32, #tpu.memory_space<vmem>>, %arg9: memref<8x2x128xf32, #tpu.memory_space<vmem>>, %arg10: memref<8x2x32xf32, #tpu.memory_space<vmem>>, %arg11: memref<2x32xf32, #tpu.memory_space<vmem>>, %arg12: memref<2x32xf32, #tpu.memory_space<vmem>>) attributes {dimension_semantics = [#tpu.dimension_semantics<arbitrary>], iteration_bounds = array<i64: 1>, scalar_prefetch = 0 : i64, scratch_operands = 4 : i64, tpu.core_type = #tpu.core_type<tc>, window_params = [{transform_indices = @transform_0, window_bounds = array<i64: 8, 2>}, {pipeline_mode = #tpu.pipeline_mode<synchronous>, transform_indices = @transform_1, window_bounds = array<i64: 1, 128>}, {pipeline_mode = #tpu.pipeline_mode<synchronous>, transform_indices = @transform_2, window_bounds = array<i64: 32, 128>}, {pipeline_mode = #tpu.pipeline_mode<synchronous>, transform_indices = @transform_3, window_bounds = array<i64: 1, 128>}, {pipeline_mode = #tpu.pipeline_mode<synchronous>, transform_indices = @transform_4, window_bounds = array<i64: 1, 32>}, {pipeline_mode = #tpu.pipeline_mode<synchronous>, transform_indices = @transform_5, window_bounds = array<i64: 1, 1>}, {transform_indices = @transform_6, window_bounds = array<i64: 2, 8>}, {transform_indices = @transform_7, window_bounds = array<i64: 2, 8, 32>}]} {
    %c0_i32 = arith.constant 0 : i32
    %0 = arith.cmpi eq, %arg0, %c0_i32 : i32
    %1 = arith.extui %0 : i1 to i32
    %c0_i32_0 = arith.constant 0 : i32
    %2 = arith.cmpi ne, %1, %c0_i32_0 : i32
    scf.if %2 {
      %cst_108 = arith.constant 0.000000e+00 : f32
      %327 = vector.broadcast %cst_108 : f32 to vector<2x32xf32>
      %c0_109 = arith.constant 0 : index
      %c0_110 = arith.constant 0 : index
      %328 = vector.load %arg11[%c0_109, %c0_110] : memref<2x32xf32, #tpu.memory_space<vmem>>, vector<2x32xf32>
      tpu.vector_store %arg11[%c0_109, %c0_110], %327 {strides = array<i32>} : memref<2x32xf32, #tpu.memory_space<vmem>>, vector<2x32xf32>,
      %cst_111 = arith.constant 0.000000e+00 : f32
      %329 = vector.broadcast %cst_111 : f32 to vector<2x32xf32>
      %c0_112 = arith.constant 0 : index
      %c0_113 = arith.constant 0 : index
      %330 = vector.load %arg12[%c0_112, %c0_113] : memref<2x32xf32, #tpu.memory_space<vmem>>, vector<2x32xf32>
      tpu.vector_store %arg12[%c0_112, %c0_113], %329 {strides = array<i32>} : memref<2x32xf32, #tpu.memory_space<vmem>>, vector<2x32xf32>,
    } else {
    }
    %c0 = arith.constant 0 : index
    %c0_1 = arith.constant 0 : index
    %3 = vector.load %arg1[%c0, %c0_1] : memref<8x2xf32, #tpu.memory_space<vmem>>, vector<8x2xf32>
    %4 = vector.shape_cast %3 : vector<8x2xf32> to vector<8x2x1xf32>
    %c0_2 = arith.constant 0 : index
    %c0_3 = arith.constant 0 : index
    %5 = vector.load %arg2[%c0_2, %c0_3] : memref<1x128xf32, #tpu.memory_space<vmem>>, vector<1x128xf32>
    %6 = vector.shape_cast %5 : vector<1x128xf32> to vector<1x1x128xf32>
    %7 = vector.broadcast %4 : vector<8x2x1xf32> to vector<8x2x128xf32>
    %8 = vector.broadcast %6 : vector<1x1x128xf32> to vector<8x2x128xf32>
    %9 = arith.mulf %7, %8 : vector<8x2x128xf32>
    %c0_4 = arith.constant 0 : index
    %c0_5 = arith.constant 0 : index
    %10 = vector.load %arg4[%c0_4, %c0_5] : memref<1x128xf32, #tpu.memory_space<vmem>>, vector<1x128xf32>
    %11 = vector.shape_cast %10 : vector<1x128xf32> to vector<1x1x128xf32>
    %12 = vector.broadcast %11 : vector<1x1x128xf32> to vector<8x2x128xf32>
    %13 = arith.addf %9, %12 : vector<8x2x128xf32>
    %c0_6 = arith.constant 0 : index
    %c0_7 = arith.constant 0 : index
    %c0_8 = arith.constant 0 : index
    %14 = vector.load %arg9[%c0_6, %c0_7, %c0_8] : memref<8x2x128xf32, #tpu.memory_space<vmem>>, vector<8x2x128xf32>
    tpu.vector_store %arg9[%c0_6, %c0_7, %c0_8], %13 {strides = array<i32>} : memref<8x2x128xf32, #tpu.memory_space<vmem>>, vector<8x2x128xf32>,
    %c0_9 = arith.constant 0 : index
    %c0_10 = arith.constant 0 : index
    %15 = vector.load %arg3[%c0_9, %c0_10] : memref<32x128xf32, #tpu.memory_space<vmem>>, vector<32x128xf32>
    %c0_11 = arith.constant 0 : index
    %c0_12 = arith.constant 0 : index
    %16 = vector.load %arg11[%c0_11, %c0_12] : memref<2x32xf32, #tpu.memory_space<vmem>>, vector<2x32xf32>
    %c0_13 = arith.constant 0 : index
    %c0_14 = arith.constant 0 : index
    %17 = vector.load %arg12[%c0_13, %c0_14] : memref<2x32xf32, #tpu.memory_space<vmem>>, vector<2x32xf32>
    %c0_i32_15 = arith.constant 0 : i32
    %18 = arith.index_cast %c0_i32_15 : i32 to index
    %c0_16 = arith.constant 0 : index
    %c0_17 = arith.constant 0 : index
    %19 = vector.load %arg9[%18, %c0_16, %c0_17] : memref<8x2x128xf32, #tpu.memory_space<vmem>>, vector<1x2x128xf32>
    %20 = vector.shape_cast %19 : vector<1x2x128xf32> to vector<2x128xf32>
    %cst = arith.constant dense<0.000000e+00> : vector<2x128xf32>
    %21 = tpu.matmul %16, %15, %cst {dimension_numbers = #tpu.dot_dimension_numbers<[1], [0], [0], [1], [0, 0, 1, 1], [], []>} : vector<2x32xf32>, vector<32x128xf32>, vector<2x128xf32> -> vector<2x128xf32>
    %22 = arith.addf %20, %21 : vector<2x128xf32>
    %23 = vector.extract_strided_slice %22 {offsets = [0, 0], sizes = [2, 32], strides = [1, 1]} : vector<2x128xf32> to vector<2x32xf32>
    %24 = arith.negf %23 : vector<2x32xf32>
    %25 = math.exp %24 : vector<2x32xf32>
    %cst_18 = arith.constant 1.000000e+00 : f32
    %26 = vector.broadcast %cst_18 : f32 to vector<2x32xf32>
    %27 = arith.addf %26, %25 : vector<2x32xf32>
    %28 = arith.divf %26, %27 : vector<2x32xf32>
    %29 = vector.extract_strided_slice %22 {offsets = [0, 32], sizes = [2, 32], strides = [1, 1]} : vector<2x128xf32> to vector<2x32xf32>
    %30 = arith.negf %29 : vector<2x32xf32>
    %31 = math.exp %30 : vector<2x32xf32>
    %cst_19 = arith.constant 1.000000e+00 : f32
    %32 = vector.broadcast %cst_19 : f32 to vector<2x32xf32>
    %33 = arith.addf %32, %31 : vector<2x32xf32>
    %34 = arith.divf %32, %33 : vector<2x32xf32>
    %35 = vector.extract_strided_slice %22 {offsets = [0, 64], sizes = [2, 32], strides = [1, 1]} : vector<2x128xf32> to vector<2x32xf32>
    %36 = math.tanh %35 : vector<2x32xf32>
    %37 = vector.extract_strided_slice %22 {offsets = [0, 96], sizes = [2, 32], strides = [1, 1]} : vector<2x128xf32> to vector<2x32xf32>
    %38 = arith.negf %37 : vector<2x32xf32>
    %39 = math.exp %38 : vector<2x32xf32>
    %cst_20 = arith.constant 1.000000e+00 : f32
    %40 = vector.broadcast %cst_20 : f32 to vector<2x32xf32>
    %41 = arith.addf %40, %39 : vector<2x32xf32>
    %42 = arith.divf %40, %41 : vector<2x32xf32>
    %43 = arith.mulf %34, %17 : vector<2x32xf32>
    %44 = arith.mulf %28, %36 : vector<2x32xf32>
    %45 = arith.addf %43, %44 : vector<2x32xf32>
    %46 = math.tanh %45 : vector<2x32xf32>
    %47 = arith.mulf %42, %46 : vector<2x32xf32>
    %48 = arith.index_cast %c0_i32_15 : i32 to index
    %c0_21 = arith.constant 0 : index
    %c0_22 = arith.constant 0 : index
    %49 = vector.load %arg10[%48, %c0_21, %c0_22] : memref<8x2x32xf32, #tpu.memory_space<vmem>>, vector<1x2x32xf32>
    %50 = vector.shape_cast %49 : vector<1x2x32xf32> to vector<2x32xf32>
    %51 = vector.shape_cast %47 : vector<2x32xf32> to vector<1x2x32xf32>
    tpu.vector_store %arg10[%48, %c0_21, %c0_22], %51 {strides = array<i32>} : memref<8x2x32xf32, #tpu.memory_space<vmem>>, vector<1x2x32xf32>,
    %c1_i32 = arith.constant 1 : i32
    %52 = arith.index_cast %c1_i32 : i32 to index
    %c0_23 = arith.constant 0 : index
    %c0_24 = arith.constant 0 : index
    %53 = vector.load %arg9[%52, %c0_23, %c0_24] : memref<8x2x128xf32, #tpu.memory_space<vmem>>, vector<1x2x128xf32>
    %54 = vector.shape_cast %53 : vector<1x2x128xf32> to vector<2x128xf32>
    %cst_25 = arith.constant dense<0.000000e+00> : vector<2x128xf32>
    %55 = tpu.matmul %47, %15, %cst_25 {dimension_numbers = #tpu.dot_dimension_numbers<[1], [0], [0], [1], [0, 0, 1, 1], [], []>} : vector<2x32xf32>, vector<32x128xf32>, vector<2x128xf32> -> vector<2x128xf32>
    %56 = arith.addf %54, %55 : vector<2x128xf32>
    %57 = vector.extract_strided_slice %56 {offsets = [0, 0], sizes = [2, 32], strides = [1, 1]} : vector<2x128xf32> to vector<2x32xf32>
    %58 = arith.negf %57 : vector<2x32xf32>
    %59 = math.exp %58 : vector<2x32xf32>
    %cst_26 = arith.constant 1.000000e+00 : f32
    %60 = vector.broadcast %cst_26 : f32 to vector<2x32xf32>
    %61 = arith.addf %60, %59 : vector<2x32xf32>
    %62 = arith.divf %60, %61 : vector<2x32xf32>
    %63 = vector.extract_strided_slice %56 {offsets = [0, 32], sizes = [2, 32], strides = [1, 1]} : vector<2x128xf32> to vector<2x32xf32>
    %64 = arith.negf %63 : vector<2x32xf32>
    %65 = math.exp %64 : vector<2x32xf32>
    %cst_27 = arith.constant 1.000000e+00 : f32
    %66 = vector.broadcast %cst_27 : f32 to vector<2x32xf32>
    %67 = arith.addf %66, %65 : vector<2x32xf32>
    %68 = arith.divf %66, %67 : vector<2x32xf32>
    %69 = vector.extract_strided_slice %56 {offsets = [0, 64], sizes = [2, 32], strides = [1, 1]} : vector<2x128xf32> to vector<2x32xf32>
    %70 = math.tanh %69 : vector<2x32xf32>
    %71 = vector.extract_strided_slice %56 {offsets = [0, 96], sizes = [2, 32], strides = [1, 1]} : vector<2x128xf32> to vector<2x32xf32>
    %72 = arith.negf %71 : vector<2x32xf32>
    %73 = math.exp %72 : vector<2x32xf32>
    %cst_28 = arith.constant 1.000000e+00 : f32
    %74 = vector.broadcast %cst_28 : f32 to vector<2x32xf32>
    %75 = arith.addf %74, %73 : vector<2x32xf32>
    %76 = arith.divf %74, %75 : vector<2x32xf32>
    %77 = arith.mulf %68, %45 : vector<2x32xf32>
    %78 = arith.mulf %62, %70 : vector<2x32xf32>
    %79 = arith.addf %77, %78 : vector<2x32xf32>
    %80 = math.tanh %79 : vector<2x32xf32>
    %81 = arith.mulf %76, %80 : vector<2x32xf32>
    %82 = arith.index_cast %c1_i32 : i32 to index
    %c0_29 = arith.constant 0 : index
    %c0_30 = arith.constant 0 : index
    %83 = vector.load %arg10[%82, %c0_29, %c0_30] : memref<8x2x32xf32, #tpu.memory_space<vmem>>, vector<1x2x32xf32>
    %84 = vector.shape_cast %83 : vector<1x2x32xf32> to vector<2x32xf32>
    %85 = vector.shape_cast %81 : vector<2x32xf32> to vector<1x2x32xf32>
    tpu.vector_store %arg10[%82, %c0_29, %c0_30], %85 {strides = array<i32>} : memref<8x2x32xf32, #tpu.memory_space<vmem>>, vector<1x2x32xf32>,
    %c2_i32 = arith.constant 2 : i32
    %86 = arith.index_cast %c2_i32 : i32 to index
    %c0_31 = arith.constant 0 : index
    %c0_32 = arith.constant 0 : index
    %87 = vector.load %arg9[%86, %c0_31, %c0_32] : memref<8x2x128xf32, #tpu.memory_space<vmem>>, vector<1x2x128xf32>
    %88 = vector.shape_cast %87 : vector<1x2x128xf32> to vector<2x128xf32>
    %cst_33 = arith.constant dense<0.000000e+00> : vector<2x128xf32>
    %89 = tpu.matmul %81, %15, %cst_33 {dimension_numbers = #tpu.dot_dimension_numbers<[1], [0], [0], [1], [0, 0, 1, 1], [], []>} : vector<2x32xf32>, vector<32x128xf32>, vector<2x128xf32> -> vector<2x128xf32>
    %90 = arith.addf %88, %89 : vector<2x128xf32>
    %91 = vector.extract_strided_slice %90 {offsets = [0, 0], sizes = [2, 32], strides = [1, 1]} : vector<2x128xf32> to vector<2x32xf32>
    %92 = arith.negf %91 : vector<2x32xf32>
    %93 = math.exp %92 : vector<2x32xf32>
    %cst_34 = arith.constant 1.000000e+00 : f32
    %94 = vector.broadcast %cst_34 : f32 to vector<2x32xf32>
    %95 = arith.addf %94, %93 : vector<2x32xf32>
    %96 = arith.divf %94, %95 : vector<2x32xf32>
    %97 = vector.extract_strided_slice %90 {offsets = [0, 32], sizes = [2, 32], strides = [1, 1]} : vector<2x128xf32> to vector<2x32xf32>
    %98 = arith.negf %97 : vector<2x32xf32>
    %99 = math.exp %98 : vector<2x32xf32>
    %cst_35 = arith.constant 1.000000e+00 : f32
    %100 = vector.broadcast %cst_35 : f32 to vector<2x32xf32>
    %101 = arith.addf %100, %99 : vector<2x32xf32>
    %102 = arith.divf %100, %101 : vector<2x32xf32>
    %103 = vector.extract_strided_slice %90 {offsets = [0, 64], sizes = [2, 32], strides = [1, 1]} : vector<2x128xf32> to vector<2x32xf32>
    %104 = math.tanh %103 : vector<2x32xf32>
    %105 = vector.extract_strided_slice %90 {offsets = [0, 96], sizes = [2, 32], strides = [1, 1]} : vector<2x128xf32> to vector<2x32xf32>
    %106 = arith.negf %105 : vector<2x32xf32>
    %107 = math.exp %106 : vector<2x32xf32>
    %cst_36 = arith.constant 1.000000e+00 : f32
    %108 = vector.broadcast %cst_36 : f32 to vector<2x32xf32>
    %109 = arith.addf %108, %107 : vector<2x32xf32>
    %110 = arith.divf %108, %109 : vector<2x32xf32>
    %111 = arith.mulf %102, %79 : vector<2x32xf32>
    %112 = arith.mulf %96, %104 : vector<2x32xf32>
    %113 = arith.addf %111, %112 : vector<2x32xf32>
    %114 = math.tanh %113 : vector<2x32xf32>
    %115 = arith.mulf %110, %114 : vector<2x32xf32>
    %116 = arith.index_cast %c2_i32 : i32 to index
    %c0_37 = arith.constant 0 : index
    %c0_38 = arith.constant 0 : index
    %117 = vector.load %arg10[%116, %c0_37, %c0_38] : memref<8x2x32xf32, #tpu.memory_space<vmem>>, vector<1x2x32xf32>
    %118 = vector.shape_cast %117 : vector<1x2x32xf32> to vector<2x32xf32>
    %119 = vector.shape_cast %115 : vector<2x32xf32> to vector<1x2x32xf32>
    tpu.vector_store %arg10[%116, %c0_37, %c0_38], %119 {strides = array<i32>} : memref<8x2x32xf32, #tpu.memory_space<vmem>>, vector<1x2x32xf32>,
    %c3_i32 = arith.constant 3 : i32
    %120 = arith.index_cast %c3_i32 : i32 to index
    %c0_39 = arith.constant 0 : index
    %c0_40 = arith.constant 0 : index
    %121 = vector.load %arg9[%120, %c0_39, %c0_40] : memref<8x2x128xf32, #tpu.memory_space<vmem>>, vector<1x2x128xf32>
    %122 = vector.shape_cast %121 : vector<1x2x128xf32> to vector<2x128xf32>
    %cst_41 = arith.constant dense<0.000000e+00> : vector<2x128xf32>
    %123 = tpu.matmul %115, %15, %cst_41 {dimension_numbers = #tpu.dot_dimension_numbers<[1], [0], [0], [1], [0, 0, 1, 1], [], []>} : vector<2x32xf32>, vector<32x128xf32>, vector<2x128xf32> -> vector<2x128xf32>
    %124 = arith.addf %122, %123 : vector<2x128xf32>
    %125 = vector.extract_strided_slice %124 {offsets = [0, 0], sizes = [2, 32], strides = [1, 1]} : vector<2x128xf32> to vector<2x32xf32>
    %126 = arith.negf %125 : vector<2x32xf32>
    %127 = math.exp %126 : vector<2x32xf32>
    %cst_42 = arith.constant 1.000000e+00 : f32
    %128 = vector.broadcast %cst_42 : f32 to vector<2x32xf32>
    %129 = arith.addf %128, %127 : vector<2x32xf32>
    %130 = arith.divf %128, %129 : vector<2x32xf32>
    %131 = vector.extract_strided_slice %124 {offsets = [0, 32], sizes = [2, 32], strides = [1, 1]} : vector<2x128xf32> to vector<2x32xf32>
    %132 = arith.negf %131 : vector<2x32xf32>
    %133 = math.exp %132 : vector<2x32xf32>
    %cst_43 = arith.constant 1.000000e+00 : f32
    %134 = vector.broadcast %cst_43 : f32 to vector<2x32xf32>
    %135 = arith.addf %134, %133 : vector<2x32xf32>
    %136 = arith.divf %134, %135 : vector<2x32xf32>
    %137 = vector.extract_strided_slice %124 {offsets = [0, 64], sizes = [2, 32], strides = [1, 1]} : vector<2x128xf32> to vector<2x32xf32>
    %138 = math.tanh %137 : vector<2x32xf32>
    %139 = vector.extract_strided_slice %124 {offsets = [0, 96], sizes = [2, 32], strides = [1, 1]} : vector<2x128xf32> to vector<2x32xf32>
    %140 = arith.negf %139 : vector<2x32xf32>
    %141 = math.exp %140 : vector<2x32xf32>
    %cst_44 = arith.constant 1.000000e+00 : f32
    %142 = vector.broadcast %cst_44 : f32 to vector<2x32xf32>
    %143 = arith.addf %142, %141 : vector<2x32xf32>
    %144 = arith.divf %142, %143 : vector<2x32xf32>
    %145 = arith.mulf %136, %113 : vector<2x32xf32>
    %146 = arith.mulf %130, %138 : vector<2x32xf32>
    %147 = arith.addf %145, %146 : vector<2x32xf32>
    %148 = math.tanh %147 : vector<2x32xf32>
    %149 = arith.mulf %144, %148 : vector<2x32xf32>
    %150 = arith.index_cast %c3_i32 : i32 to index
    %c0_45 = arith.constant 0 : index
    %c0_46 = arith.constant 0 : index
    %151 = vector.load %arg10[%150, %c0_45, %c0_46] : memref<8x2x32xf32, #tpu.memory_space<vmem>>, vector<1x2x32xf32>
    %152 = vector.shape_cast %151 : vector<1x2x32xf32> to vector<2x32xf32>
    %153 = vector.shape_cast %149 : vector<2x32xf32> to vector<1x2x32xf32>
    tpu.vector_store %arg10[%150, %c0_45, %c0_46], %153 {strides = array<i32>} : memref<8x2x32xf32, #tpu.memory_space<vmem>>, vector<1x2x32xf32>,
    %c4_i32 = arith.constant 4 : i32
    %154 = arith.index_cast %c4_i32 : i32 to index
    %c0_47 = arith.constant 0 : index
    %c0_48 = arith.constant 0 : index
    %155 = vector.load %arg9[%154, %c0_47, %c0_48] : memref<8x2x128xf32, #tpu.memory_space<vmem>>, vector<1x2x128xf32>
    %156 = vector.shape_cast %155 : vector<1x2x128xf32> to vector<2x128xf32>
    %cst_49 = arith.constant dense<0.000000e+00> : vector<2x128xf32>
    %157 = tpu.matmul %149, %15, %cst_49 {dimension_numbers = #tpu.dot_dimension_numbers<[1], [0], [0], [1], [0, 0, 1, 1], [], []>} : vector<2x32xf32>, vector<32x128xf32>, vector<2x128xf32> -> vector<2x128xf32>
    %158 = arith.addf %156, %157 : vector<2x128xf32>
    %159 = vector.extract_strided_slice %158 {offsets = [0, 0], sizes = [2, 32], strides = [1, 1]} : vector<2x128xf32> to vector<2x32xf32>
    %160 = arith.negf %159 : vector<2x32xf32>
    %161 = math.exp %160 : vector<2x32xf32>
    %cst_50 = arith.constant 1.000000e+00 : f32
    %162 = vector.broadcast %cst_50 : f32 to vector<2x32xf32>
    %163 = arith.addf %162, %161 : vector<2x32xf32>
    %164 = arith.divf %162, %163 : vector<2x32xf32>
    %165 = vector.extract_strided_slice %158 {offsets = [0, 32], sizes = [2, 32], strides = [1, 1]} : vector<2x128xf32> to vector<2x32xf32>
    %166 = arith.negf %165 : vector<2x32xf32>
    %167 = math.exp %166 : vector<2x32xf32>
    %cst_51 = arith.constant 1.000000e+00 : f32
    %168 = vector.broadcast %cst_51 : f32 to vector<2x32xf32>
    %169 = arith.addf %168, %167 : vector<2x32xf32>
    %170 = arith.divf %168, %169 : vector<2x32xf32>
    %171 = vector.extract_strided_slice %158 {offsets = [0, 64], sizes = [2, 32], strides = [1, 1]} : vector<2x128xf32> to vector<2x32xf32>
    %172 = math.tanh %171 : vector<2x32xf32>
    %173 = vector.extract_strided_slice %158 {offsets = [0, 96], sizes = [2, 32], strides = [1, 1]} : vector<2x128xf32> to vector<2x32xf32>
    %174 = arith.negf %173 : vector<2x32xf32>
    %175 = math.exp %174 : vector<2x32xf32>
    %cst_52 = arith.constant 1.000000e+00 : f32
    %176 = vector.broadcast %cst_52 : f32 to vector<2x32xf32>
    %177 = arith.addf %176, %175 : vector<2x32xf32>
    %178 = arith.divf %176, %177 : vector<2x32xf32>
    %179 = arith.mulf %170, %147 : vector<2x32xf32>
    %180 = arith.mulf %164, %172 : vector<2x32xf32>
    %181 = arith.addf %179, %180 : vector<2x32xf32>
    %182 = math.tanh %181 : vector<2x32xf32>
    %183 = arith.mulf %178, %182 : vector<2x32xf32>
    %184 = arith.index_cast %c4_i32 : i32 to index
    %c0_53 = arith.constant 0 : index
    %c0_54 = arith.constant 0 : index
    %185 = vector.load %arg10[%184, %c0_53, %c0_54] : memref<8x2x32xf32, #tpu.memory_space<vmem>>, vector<1x2x32xf32>
    %186 = vector.shape_cast %185 : vector<1x2x32xf32> to vector<2x32xf32>
    %187 = vector.shape_cast %183 : vector<2x32xf32> to vector<1x2x32xf32>
    tpu.vector_store %arg10[%184, %c0_53, %c0_54], %187 {strides = array<i32>} : memref<8x2x32xf32, #tpu.memory_space<vmem>>, vector<1x2x32xf32>,
    %c5_i32 = arith.constant 5 : i32
    %188 = arith.index_cast %c5_i32 : i32 to index
    %c0_55 = arith.constant 0 : index
    %c0_56 = arith.constant 0 : index
    %189 = vector.load %arg9[%188, %c0_55, %c0_56] : memref<8x2x128xf32, #tpu.memory_space<vmem>>, vector<1x2x128xf32>
    %190 = vector.shape_cast %189 : vector<1x2x128xf32> to vector<2x128xf32>
    %cst_57 = arith.constant dense<0.000000e+00> : vector<2x128xf32>
    %191 = tpu.matmul %183, %15, %cst_57 {dimension_numbers = #tpu.dot_dimension_numbers<[1], [0], [0], [1], [0, 0, 1, 1], [], []>} : vector<2x32xf32>, vector<32x128xf32>, vector<2x128xf32> -> vector<2x128xf32>
    %192 = arith.addf %190, %191 : vector<2x128xf32>
    %193 = vector.extract_strided_slice %192 {offsets = [0, 0], sizes = [2, 32], strides = [1, 1]} : vector<2x128xf32> to vector<2x32xf32>
    %194 = arith.negf %193 : vector<2x32xf32>
    %195 = math.exp %194 : vector<2x32xf32>
    %cst_58 = arith.constant 1.000000e+00 : f32
    %196 = vector.broadcast %cst_58 : f32 to vector<2x32xf32>
    %197 = arith.addf %196, %195 : vector<2x32xf32>
    %198 = arith.divf %196, %197 : vector<2x32xf32>
    %199 = vector.extract_strided_slice %192 {offsets = [0, 32], sizes = [2, 32], strides = [1, 1]} : vector<2x128xf32> to vector<2x32xf32>
    %200 = arith.negf %199 : vector<2x32xf32>
    %201 = math.exp %200 : vector<2x32xf32>
    %cst_59 = arith.constant 1.000000e+00 : f32
    %202 = vector.broadcast %cst_59 : f32 to vector<2x32xf32>
    %203 = arith.addf %202, %201 : vector<2x32xf32>
    %204 = arith.divf %202, %203 : vector<2x32xf32>
    %205 = vector.extract_strided_slice %192 {offsets = [0, 64], sizes = [2, 32], strides = [1, 1]} : vector<2x128xf32> to vector<2x32xf32>
    %206 = math.tanh %205 : vector<2x32xf32>
    %207 = vector.extract_strided_slice %192 {offsets = [0, 96], sizes = [2, 32], strides = [1, 1]} : vector<2x128xf32> to vector<2x32xf32>
    %208 = arith.negf %207 : vector<2x32xf32>
    %209 = math.exp %208 : vector<2x32xf32>
    %cst_60 = arith.constant 1.000000e+00 : f32
    %210 = vector.broadcast %cst_60 : f32 to vector<2x32xf32>
    %211 = arith.addf %210, %209 : vector<2x32xf32>
    %212 = arith.divf %210, %211 : vector<2x32xf32>
    %213 = arith.mulf %204, %181 : vector<2x32xf32>
    %214 = arith.mulf %198, %206 : vector<2x32xf32>
    %215 = arith.addf %213, %214 : vector<2x32xf32>
    %216 = math.tanh %215 : vector<2x32xf32>
    %217 = arith.mulf %212, %216 : vector<2x32xf32>
    %218 = arith.index_cast %c5_i32 : i32 to index
    %c0_61 = arith.constant 0 : index
    %c0_62 = arith.constant 0 : index
    %219 = vector.load %arg10[%218, %c0_61, %c0_62] : memref<8x2x32xf32, #tpu.memory_space<vmem>>, vector<1x2x32xf32>
    %220 = vector.shape_cast %219 : vector<1x2x32xf32> to vector<2x32xf32>
    %221 = vector.shape_cast %217 : vector<2x32xf32> to vector<1x2x32xf32>
    tpu.vector_store %arg10[%218, %c0_61, %c0_62], %221 {strides = array<i32>} : memref<8x2x32xf32, #tpu.memory_space<vmem>>, vector<1x2x32xf32>,
    %c6_i32 = arith.constant 6 : i32
    %222 = arith.index_cast %c6_i32 : i32 to index
    %c0_63 = arith.constant 0 : index
    %c0_64 = arith.constant 0 : index
    %223 = vector.load %arg9[%222, %c0_63, %c0_64] : memref<8x2x128xf32, #tpu.memory_space<vmem>>, vector<1x2x128xf32>
    %224 = vector.shape_cast %223 : vector<1x2x128xf32> to vector<2x128xf32>
    %cst_65 = arith.constant dense<0.000000e+00> : vector<2x128xf32>
    %225 = tpu.matmul %217, %15, %cst_65 {dimension_numbers = #tpu.dot_dimension_numbers<[1], [0], [0], [1], [0, 0, 1, 1], [], []>} : vector<2x32xf32>, vector<32x128xf32>, vector<2x128xf32> -> vector<2x128xf32>
    %226 = arith.addf %224, %225 : vector<2x128xf32>
    %227 = vector.extract_strided_slice %226 {offsets = [0, 0], sizes = [2, 32], strides = [1, 1]} : vector<2x128xf32> to vector<2x32xf32>
    %228 = arith.negf %227 : vector<2x32xf32>
    %229 = math.exp %228 : vector<2x32xf32>
    %cst_66 = arith.constant 1.000000e+00 : f32
    %230 = vector.broadcast %cst_66 : f32 to vector<2x32xf32>
    %231 = arith.addf %230, %229 : vector<2x32xf32>
    %232 = arith.divf %230, %231 : vector<2x32xf32>
    %233 = vector.extract_strided_slice %226 {offsets = [0, 32], sizes = [2, 32], strides = [1, 1]} : vector<2x128xf32> to vector<2x32xf32>
    %234 = arith.negf %233 : vector<2x32xf32>
    %235 = math.exp %234 : vector<2x32xf32>
    %cst_67 = arith.constant 1.000000e+00 : f32
    %236 = vector.broadcast %cst_67 : f32 to vector<2x32xf32>
    %237 = arith.addf %236, %235 : vector<2x32xf32>
    %238 = arith.divf %236, %237 : vector<2x32xf32>
    %239 = vector.extract_strided_slice %226 {offsets = [0, 64], sizes = [2, 32], strides = [1, 1]} : vector<2x128xf32> to vector<2x32xf32>
    %240 = math.tanh %239 : vector<2x32xf32>
    %241 = vector.extract_strided_slice %226 {offsets = [0, 96], sizes = [2, 32], strides = [1, 1]} : vector<2x128xf32> to vector<2x32xf32>
    %242 = arith.negf %241 : vector<2x32xf32>
    %243 = math.exp %242 : vector<2x32xf32>
    %cst_68 = arith.constant 1.000000e+00 : f32
    %244 = vector.broadcast %cst_68 : f32 to vector<2x32xf32>
    %245 = arith.addf %244, %243 : vector<2x32xf32>
    %246 = arith.divf %244, %245 : vector<2x32xf32>
    %247 = arith.mulf %238, %215 : vector<2x32xf32>
    %248 = arith.mulf %232, %240 : vector<2x32xf32>
    %249 = arith.addf %247, %248 : vector<2x32xf32>
    %250 = math.tanh %249 : vector<2x32xf32>
    %251 = arith.mulf %246, %250 : vector<2x32xf32>
    %252 = arith.index_cast %c6_i32 : i32 to index
    %c0_69 = arith.constant 0 : index
    %c0_70 = arith.constant 0 : index
    %253 = vector.load %arg10[%252, %c0_69, %c0_70] : memref<8x2x32xf32, #tpu.memory_space<vmem>>, vector<1x2x32xf32>
    %254 = vector.shape_cast %253 : vector<1x2x32xf32> to vector<2x32xf32>
    %255 = vector.shape_cast %251 : vector<2x32xf32> to vector<1x2x32xf32>
    tpu.vector_store %arg10[%252, %c0_69, %c0_70], %255 {strides = array<i32>} : memref<8x2x32xf32, #tpu.memory_space<vmem>>, vector<1x2x32xf32>,
    %c7_i32 = arith.constant 7 : i32
    %256 = arith.index_cast %c7_i32 : i32 to index
    %c0_71 = arith.constant 0 : index
    %c0_72 = arith.constant 0 : index
    %257 = vector.load %arg9[%256, %c0_71, %c0_72] : memref<8x2x128xf32, #tpu.memory_space<vmem>>, vector<1x2x128xf32>
    %258 = vector.shape_cast %257 : vector<1x2x128xf32> to vector<2x128xf32>
    %cst_73 = arith.constant dense<0.000000e+00> : vector<2x128xf32>
    %259 = tpu.matmul %251, %15, %cst_73 {dimension_numbers = #tpu.dot_dimension_numbers<[1], [0], [0], [1], [0, 0, 1, 1], [], []>} : vector<2x32xf32>, vector<32x128xf32>, vector<2x128xf32> -> vector<2x128xf32>
    %260 = arith.addf %258, %259 : vector<2x128xf32>
    %261 = vector.extract_strided_slice %260 {offsets = [0, 0], sizes = [2, 32], strides = [1, 1]} : vector<2x128xf32> to vector<2x32xf32>
    %262 = arith.negf %261 : vector<2x32xf32>
    %263 = math.exp %262 : vector<2x32xf32>
    %cst_74 = arith.constant 1.000000e+00 : f32
    %264 = vector.broadcast %cst_74 : f32 to vector<2x32xf32>
    %265 = arith.addf %264, %263 : vector<2x32xf32>
    %266 = arith.divf %264, %265 : vector<2x32xf32>
    %267 = vector.extract_strided_slice %260 {offsets = [0, 32], sizes = [2, 32], strides = [1, 1]} : vector<2x128xf32> to vector<2x32xf32>
    %268 = arith.negf %267 : vector<2x32xf32>
    %269 = math.exp %268 : vector<2x32xf32>
    %cst_75 = arith.constant 1.000000e+00 : f32
    %270 = vector.broadcast %cst_75 : f32 to vector<2x32xf32>
    %271 = arith.addf %270, %269 : vector<2x32xf32>
    %272 = arith.divf %270, %271 : vector<2x32xf32>
    %273 = vector.extract_strided_slice %260 {offsets = [0, 64], sizes = [2, 32], strides = [1, 1]} : vector<2x128xf32> to vector<2x32xf32>
    %274 = math.tanh %273 : vector<2x32xf32>
    %275 = vector.extract_strided_slice %260 {offsets = [0, 96], sizes = [2, 32], strides = [1, 1]} : vector<2x128xf32> to vector<2x32xf32>
    %276 = arith.negf %275 : vector<2x32xf32>
    %277 = math.exp %276 : vector<2x32xf32>
    %cst_76 = arith.constant 1.000000e+00 : f32
    %278 = vector.broadcast %cst_76 : f32 to vector<2x32xf32>
    %279 = arith.addf %278, %277 : vector<2x32xf32>
    %280 = arith.divf %278, %279 : vector<2x32xf32>
    %281 = arith.mulf %272, %249 : vector<2x32xf32>
    %282 = arith.mulf %266, %274 : vector<2x32xf32>
    %283 = arith.addf %281, %282 : vector<2x32xf32>
    %284 = math.tanh %283 : vector<2x32xf32>
    %285 = arith.mulf %280, %284 : vector<2x32xf32>
    %286 = arith.index_cast %c7_i32 : i32 to index
    %c0_77 = arith.constant 0 : index
    %c0_78 = arith.constant 0 : index
    %287 = vector.load %arg10[%286, %c0_77, %c0_78] : memref<8x2x32xf32, #tpu.memory_space<vmem>>, vector<1x2x32xf32>
    %288 = vector.shape_cast %287 : vector<1x2x32xf32> to vector<2x32xf32>
    %289 = vector.shape_cast %285 : vector<2x32xf32> to vector<1x2x32xf32>
    tpu.vector_store %arg10[%286, %c0_77, %c0_78], %289 {strides = array<i32>} : memref<8x2x32xf32, #tpu.memory_space<vmem>>, vector<1x2x32xf32>,
    %c8_i32 = arith.constant 8 : i32
    %c0_79 = arith.constant 0 : index
    %c0_80 = arith.constant 0 : index
    %290 = vector.load %arg11[%c0_79, %c0_80] : memref<2x32xf32, #tpu.memory_space<vmem>>, vector<2x32xf32>
    tpu.vector_store %arg11[%c0_79, %c0_80], %285 {strides = array<i32>} : memref<2x32xf32, #tpu.memory_space<vmem>>, vector<2x32xf32>,
    %c0_81 = arith.constant 0 : index
    %c0_82 = arith.constant 0 : index
    %291 = vector.load %arg12[%c0_81, %c0_82] : memref<2x32xf32, #tpu.memory_space<vmem>>, vector<2x32xf32>
    tpu.vector_store %arg12[%c0_81, %c0_82], %283 {strides = array<i32>} : memref<2x32xf32, #tpu.memory_space<vmem>>, vector<2x32xf32>,
    %c0_83 = arith.constant 0 : index
    %c0_84 = arith.constant 0 : index
    %292 = vector.load %arg5[%c0_83, %c0_84] : memref<1x32xf32, #tpu.memory_space<vmem>>, vector<1x32xf32>
    %c0_85 = arith.constant 0 : index
    %c0_86 = arith.constant 0 : index
    %293 = vector.load %arg6[%c0_85, %c0_86] : memref<1x1xf32, #tpu.memory_space<vmem>>, vector<1x1xf32>
    %294 = vector.extract %293[0, 0] : f32 from vector<1x1xf32>
    %c0_87 = arith.constant 0 : index
    %c0_88 = arith.constant 0 : index
    %c0_89 = arith.constant 0 : index
    %295 = vector.load %arg10[%c0_87, %c0_88, %c0_89] : memref<8x2x32xf32, #tpu.memory_space<vmem>>, vector<8x1x32xf32>
    %296 = vector.shape_cast %295 : vector<8x1x32xf32> to vector<8x32xf32>
    %c0_90 = arith.constant 0 : index
    %c0_91 = arith.constant 0 : index
    %c0_92 = arith.constant 0 : index
    %297 = vector.load %arg8[%c0_90, %c0_91, %c0_92] : memref<2x8x32xf32, #tpu.memory_space<vmem>>, vector<1x8x32xf32>
    %298 = vector.shape_cast %297 : vector<1x8x32xf32> to vector<8x32xf32>
    %299 = vector.shape_cast %296 : vector<8x32xf32> to vector<1x8x32xf32>
    tpu.vector_store %arg8[%c0_90, %c0_91, %c0_92], %299 {strides = array<i32>} : memref<2x8x32xf32, #tpu.memory_space<vmem>>, vector<1x8x32xf32>,
    %300 = vector.broadcast %292 : vector<1x32xf32> to vector<8x32xf32>
    %301 = arith.mulf %296, %300 : vector<8x32xf32>
    %cst_93 = arith.constant dense<0.000000e+00> : vector<8xf32>
    %302 = vector.multi_reduction <add>, %301, %cst_93 [1] : vector<8x32xf32> to vector<8xf32>
    %303 = vector.broadcast %294 : f32 to vector<8xf32>
    %304 = arith.addf %302, %303 : vector<8xf32>
    %c0_94 = arith.constant 0 : index
    %c0_95 = arith.constant 0 : index
    %305 = vector.load %arg1[%c0_94, %c0_95] : memref<8x2xf32, #tpu.memory_space<vmem>>, vector<8x1xf32>
    %306 = vector.shape_cast %305 : vector<8x1xf32> to vector<8xf32>
    %307 = arith.addf %304, %306 : vector<8xf32>
    %c0_96 = arith.constant 0 : index
    %c0_97 = arith.constant 0 : index
    %308 = vector.load %arg7[%c0_96, %c0_97] : memref<2x8xf32, #tpu.memory_space<vmem>>, vector<1x8xf32>
    %309 = vector.shape_cast %308 : vector<1x8xf32> to vector<8xf32>
    %310 = vector.shape_cast %307 : vector<8xf32> to vector<1x8xf32>
    tpu.vector_store %arg7[%c0_96, %c0_97], %310 {strides = array<i32>} : memref<2x8xf32, #tpu.memory_space<vmem>>, vector<1x8xf32>,
    %c0_98 = arith.constant 0 : index
    %c1 = arith.constant 1 : index
    %c0_99 = arith.constant 0 : index
    %311 = vector.load %arg10[%c0_98, %c1, %c0_99] : memref<8x2x32xf32, #tpu.memory_space<vmem>>, vector<8x1x32xf32>
    %312 = vector.shape_cast %311 : vector<8x1x32xf32> to vector<8x32xf32>
    %c1_100 = arith.constant 1 : index
    %c0_101 = arith.constant 0 : index
    %c0_102 = arith.constant 0 : index
    %313 = vector.load %arg8[%c1_100, %c0_101, %c0_102] : memref<2x8x32xf32, #tpu.memory_space<vmem>>, vector<1x8x32xf32>
    %314 = vector.shape_cast %313 : vector<1x8x32xf32> to vector<8x32xf32>
    %315 = vector.shape_cast %312 : vector<8x32xf32> to vector<1x8x32xf32>
    tpu.vector_store %arg8[%c1_100, %c0_101, %c0_102], %315 {strides = array<i32>} : memref<2x8x32xf32, #tpu.memory_space<vmem>>, vector<1x8x32xf32>,
    %316 = vector.broadcast %292 : vector<1x32xf32> to vector<8x32xf32>
    %317 = arith.mulf %312, %316 : vector<8x32xf32>
    %cst_103 = arith.constant dense<0.000000e+00> : vector<8xf32>
    %318 = vector.multi_reduction <add>, %317, %cst_103 [1] : vector<8x32xf32> to vector<8xf32>
    %319 = vector.broadcast %294 : f32 to vector<8xf32>
    %320 = arith.addf %318, %319 : vector<8xf32>
    %c0_104 = arith.constant 0 : index
    %c1_105 = arith.constant 1 : index
    %321 = vector.load %arg1[%c0_104, %c1_105] : memref<8x2xf32, #tpu.memory_space<vmem>>, vector<8x1xf32>
    %322 = vector.shape_cast %321 : vector<8x1xf32> to vector<8xf32>
    %323 = arith.addf %320, %322 : vector<8xf32>
    %c1_106 = arith.constant 1 : index
    %c0_107 = arith.constant 0 : index
    %324 = vector.load %arg7[%c1_106, %c0_107] : memref<2x8xf32, #tpu.memory_space<vmem>>, vector<1x8xf32>
    %325 = vector.shape_cast %324 : vector<1x8xf32> to vector<8xf32>
    %326 = vector.shape_cast %323 : vector<8xf32> to vector<1x8xf32>
    tpu.vector_store %arg7[%c1_106, %c0_107], %326 {strides = array<i32>} : memref<2x8xf32, #tpu.memory_space<vmem>>, vector<1x8xf32>,
    return
  }
  func.func @transform_0(%arg0: i32) -> (i32, i32) {
    %c0_i32 = arith.constant 0 : i32
    %c0_i32_0 = arith.constant 0 : i32
    return %arg0, %c0_i32 : i32, i32
  }
  func.func @transform_1(%arg0: i32) -> (i32, i32) {
    %c0_i32 = arith.constant 0 : i32
    %c0_i32_0 = arith.constant 0 : i32
    %c0_i32_1 = arith.constant 0 : i32
    return %c0_i32, %c0_i32_0 : i32, i32
  }
  func.func @transform_2(%arg0: i32) -> (i32, i32) {
    %c0_i32 = arith.constant 0 : i32
    %c0_i32_0 = arith.constant 0 : i32
    %c0_i32_1 = arith.constant 0 : i32
    return %c0_i32, %c0_i32_0 : i32, i32
  }
  func.func @transform_3(%arg0: i32) -> (i32, i32) {
    %c0_i32 = arith.constant 0 : i32
    %c0_i32_0 = arith.constant 0 : i32
    %c0_i32_1 = arith.constant 0 : i32
    return %c0_i32, %c0_i32_0 : i32, i32
  }
  func.func @transform_4(%arg0: i32) -> (i32, i32) {
    %c0_i32 = arith.constant 0 : i32
    %c0_i32_0 = arith.constant 0 : i32
    %c0_i32_1 = arith.constant 0 : i32
    return %c0_i32, %c0_i32_0 : i32, i32
  }
  func.func @transform_5(%arg0: i32) -> (i32, i32) {
    %c0_i32 = arith.constant 0 : i32
    %c0_i32_0 = arith.constant 0 : i32
    %c0_i32_1 = arith.constant 0 : i32
    return %c0_i32, %c0_i32_0 : i32, i32
  }
  func.func @transform_6(%arg0: i32) -> (i32, i32) {
    %c0_i32 = arith.constant 0 : i32
    %c0_i32_0 = arith.constant 0 : i32
    return %c0_i32, %arg0 : i32, i32
  }
  func.func @transform_7(%arg0: i32) -> (i32, i32, i32) {
    %c0_i32 = arith.constant 0 : i32
    %c0_i32_0 = arith.constant 0 : i32
    %c0_i32_1 = arith.constant 0 : i32
    return %c0_i32, %arg0, %c0_i32_0 : i32, i32, i32
  }
}

</mosaic_0001>

<llo_original>
// kernel: audio_rnn_forward.1
$region0: #{audio_rnn_forward.1}
  #allocation0 [shape = 'u32[]', space=smem, size = 0x4, offset = 0x4, fixed_abs, tag = 'smem constant byte address 0x4 - core index']
  #allocation1 [shape = 'u32[144,128]{1,0:T(1,128)}', space=vmem, size = 0x12000, scoped, tag = 'internal scratch']
  #allocation2 [shape = 'f32[8,2,128]{2,1,0:T(2,128)}', space=vmem, size = 0x2000, scoped, tag = 'scratch operand']
  #allocation3 [shape = 'f32[8,2,32]{2,1,0:T(2,128)}', space=vmem, size = 0x2000, scoped, tag = 'scratch operand']
  #allocation4 [shape = 'f32[2,32]{1,0:T(2,128)}', space=vmem, size = 0x400, scoped, tag = 'scratch operand']
  #allocation5 [shape = 'f32[2,32]{1,0:T(2,128)}', space=vmem, size = 0x400, scoped, tag = 'scratch operand']
  #allocation6 [shape = 'f32[1,1]{1,0:T(1,128)S(1)}', space=vmem, size = 0x200, scoped, tag = 'scoped memory for audio_rnn_forward.1']
  %s0 = inlined_call_operand.vmem [shape: f32[8,2], index: 0, kind: input, shape index: {}]
  %s1 = inlined_call_operand.vmem [shape: f32[1,128], index: 1, kind: input, shape index: {}]
  %s2 = inlined_call_operand.hbm [shape: f32[32,128], index: 2, kind: input, shape index: {}]
  %s3 = inlined_call_operand.vmem [shape: f32[1,128], index: 3, kind: input, shape index: {}]
  %s4 = inlined_call_operand.vmem [shape: f32[1,32], index: 4, kind: input, shape index: {}]
  %s5 = inlined_call_operand.<no memory space> [shape: f32[1,1], index: 5, kind: input, shape index: {}]
  %s6 = inlined_call_operand.hbm [shape: f32[2,8], index: 6, kind: output, shape index: {0}]
  %s7 = inlined_call_operand.hbm [shape: f32[2,8,32], index: 7, kind: output, shape index: {1}]
  %8 = xla_tuple %s6, %s7
  %s9 = sld [smem:[#allocation0]]
  $region50: #{audio_rnn_forward.1} parent=0
    _
  %s11 = ssub.s32 1, %s9
  %s12 = scalar_select 0, %s11, %s9
  %v13 = vstv %s5
  %14 = vst [vmem:[#allocation6] sm:$0x1] %v13
  $region1: #{audio_rnn_forward.1} parent=0
    #allocation7 [shape = 'u8[16384]{0}', space=vmem, size = 0x4000, scoped, tag = 'input window, operand 2, single buffered']
    #allocation8 [shape = 's32[1]{0}', space=sflag, size = 0x4, scoped, tag = 'scoped memory for audio_rnn_forward.1']
    #allocation9 [shape = 's32[1]{0}', space=sflag, size = 0x4, scoped, tag = 'scoped memory for audio_rnn_forward.1']
    #allocation10 [shape = 'u8[1024]{0}', space=vmem, size = 0x400, scoped, tag = 'output window, operand 0, single buffered']
    #allocation11 [shape = 'u8[8192]{0}', space=vmem, size = 0x2000, scoped, tag = 'output window, operand 1, single buffered']
    #allocation12 [shape = 's32[1]{0}', space=sflag, size = 0x4, scoped, tag = 'scoped memory for audio_rnn_forward.1']
    %15 = vsyncpa [#allocation8], 0
    %16 = vsyncpa [#allocation9], 0
    %17 = vsyncpa [#allocation12], 0
    // Predicated region
    $region2: #{audio_rnn_forward.1} parent=1 // pred_check
      _
    $region3: #{audio_rnn_forward.1} parent=1 // pred_check_branch
      %19 = sbr.rel (0) target = $region5
    $region4: #{audio_rnn_forward.1} parent=1 // pred_region
      _
    $region5: #{audio_rnn_forward.1} parent=1 // pred_fallthru
      _
    // Predicated region
    $region6: #{audio_rnn_forward.1} parent=1 // pred_check
      _
    $region7: #{audio_rnn_forward.1} parent=1 // pred_check_branch
      %21 = sbr.rel (0) target = $region9
    $region8: #{audio_rnn_forward.1} parent=1 // pred_region
      _
    $region9: #{audio_rnn_forward.1} parent=1 // pred_fallthru
      _
    // Predicated region
    $region10: #{audio_rnn_forward.1} parent=1 // pred_check
      _
    $region11: #{audio_rnn_forward.1} parent=1 // pred_check_branch
      %23 = sbr.rel (0) target = $region13
    $region12: #{audio_rnn_forward.1} parent=1 // pred_region
      %s25 = ssub.s32 512, 512
      %26 = vsyncadd [#allocation8], %s25
      %s27 = sshll.u32 [#allocation7], 4
      %s28 = int_to_ptr.vmem [resolvable:$true] %s27
      %33 = dma.hbm_to_vmem [thread:$0]  %s2, 512, %s28, [#allocation8], 128, 128, 8
    $region13: #{audio_rnn_forward.1} parent=1 // pred_fallthru
      _
    // Predicated region
    $region14: #{audio_rnn_forward.1} parent=1 // pred_check
      _
    $region15: #{audio_rnn_forward.1} parent=1 // pred_check_branch
      %35 = sbr.rel (0) target = $region17
    $region16: #{audio_rnn_forward.1} parent=1 // pred_region
      _
    $region17: #{audio_rnn_forward.1} parent=1 // pred_fallthru
      _
    // Predicated region
    $region18: #{audio_rnn_forward.1} parent=1 // pred_check
      _
    $region19: #{audio_rnn_forward.1} parent=1 // pred_check_branch
      %37 = sbr.rel (0) target = $region21
    $region20: #{audio_rnn_forward.1} parent=1 // pred_region
      _
    $region21: #{audio_rnn_forward.1} parent=1 // pred_fallthru
      _
    // Predicated region
    $region22: #{audio_rnn_forward.1} parent=1 // pred_check
      _
    $region23: #{audio_rnn_forward.1} parent=1 // pred_check_branch
      %39 = sbr.rel (0) target = $region25
    $region24: #{audio_rnn_forward.1} parent=1 // pred_region
      _
    $region25: #{audio_rnn_forward.1} parent=1 // pred_fallthru
      _
    // Predicated region
    $region26: #{audio_rnn_forward.1} parent=1 // pred_check
      _
    $region27: #{audio_rnn_forward.1} parent=1 // pred_check_branch
      %41 = sbr.rel (0) target = $region29
    $region28: #{audio_rnn_forward.1} parent=1 // pred_region
      %42 = dma.done [#allocation8], 512
    $region29: #{audio_rnn_forward.1} parent=1 // pred_fallthru
      _
    %p43 = scmp.eq.s32.totalorder 0, 0
    // Predicated region
    $region30: #{audio_rnn_forward.1} parent=1 // pred_check
      %p44 = pneg %p43
    $region31: #{audio_rnn_forward.1} parent=1 // pred_check_branch
      %46 = sbr.rel (%p44) target = $region33
    $region32: #{audio_rnn_forward.1} parent=1 // pred_region
      %vm47 = vcmask 254976
      %48 = vst.msk [vmem:[#allocation4] sm:$0x3] %vm47, 0.0
      %49 = vst.msk [vmem:[#allocation5] sm:$0x3] %vm47, 0.0
    $region33: #{audio_rnn_forward.1} parent=1 // pred_fallthru
      _
    %v50 = vld [vmem:[%s0] sm:$0xff]
    %v51 = vlaneseq
    %v52 = vshrl.u32 %v51, 7
    %v53 = vsub.s32 0, %v52
    %v54 = vrot.slane %v50, %v53
    %56 = vbcast.lane.b32.xlu0 %v54, 256
    %v57 = vpop.permute.xlu0 %56
    %v58 = vlaneseq
    %v59 = vshrl.u32 %v58, 7
    %v60 = vsub.s32 1, %v59
    %v61 = vrot.slane %v50, %v60
    %63 = vbcast.lane.b32.xlu0 %v61, 256
    %v64 = vpop.permute.xlu0 %63
    %v65 = vlaneseq
    %v66 = vshrl.u32 %v65, 7
    %v67 = vsub.s32 2, %v66
    %v68 = vrot.slane %v50, %v67
    %70 = vbcast.lane.b32.xlu0 %v68, 256
    %v71 = vpop.permute.xlu0 %70
    %v72 = vlaneseq
    %v73 = vshrl.u32 %v72, 7
    %v74 = vsub.s32 3, %v73
    %v75 = vrot.slane %v50, %v74
    %77 = vbcast.lane.b32.xlu0 %v75, 256
    %v78 = vpop.permute.xlu0 %77
    %v79 = vlaneseq
    %v80 = vshrl.u32 %v79, 7
    %v81 = vsub.s32 4, %v80
    %v82 = vrot.slane %v50, %v81
    %84 = vbcast.lane.b32.xlu0 %v82, 256
    %v85 = vpop.permute.xlu0 %84
    %v86 = vlaneseq
    %v87 = vshrl.u32 %v86, 7
    %v88 = vsub.s32 5, %v87
    %v89 = vrot.slane %v50, %v88
    %91 = vbcast.lane.b32.xlu0 %v89, 256
    %v92 = vpop.permute.xlu0 %91
    %v93 = vlaneseq
    %v94 = vshrl.u32 %v93, 7
    %v95 = vsub.s32 6, %v94
    %v96 = vrot.slane %v50, %v95
    %98 = vbcast.lane.b32.xlu0 %v96, 256
    %v99 = vpop.permute.xlu0 %98
    %v100 = vlaneseq
    %v101 = vshrl.u32 %v100, 7
    %v102 = vsub.s32 7, %v101
    %v103 = vrot.slane %v50, %v102
    %105 = vbcast.lane.b32.xlu0 %v103, 256
    %v106 = vpop.permute.xlu0 %105
    %v107 = vld [vmem:[%s1] sm:$0x1]
    %v109 = vlaneseq
    %v110 = vshrl.u32 %v109, 7
    %v111 = vsub.s32 0, %v110
    %v112 = vrot.slane %v107, %v111
    %v114 = vmul.f32 %v57, %v112
    %v115 = vmul.f32 %v64, %v112
    %v116 = vmul.f32 %v71, %v112
    %v117 = vmul.f32 %v78, %v112
    %v118 = vmul.f32 %v85, %v112
    %v119 = vmul.f32 %v92, %v112
    %v120 = vmul.f32 %v99, %v112
    %v121 = vmul.f32 %v106, %v112
    %v122 = vld [vmem:[%s3] sm:$0x1]
    %v124 = vlaneseq
    %v125 = vshrl.u32 %v124, 7
    %v126 = vsub.s32 0, %v125
    %v127 = vrot.slane %v122, %v126
    %v129 = vadd.f32 %v114, %v127
    %v130 = vadd.f32 %v115, %v127
    %v131 = vadd.f32 %v116, %v127
    %v132 = vadd.f32 %v117, %v127
    %v133 = vadd.f32 %v118, %v127
    %v134 = vadd.f32 %v119, %v127
    %v135 = vadd.f32 %v120, %v127
    %v136 = vadd.f32 %v121, %v127
    %137 = vst [vmem:[#allocation2] sm:$0x3] %v129
    %138 = vst [vmem:[#allocation2 + $0x2] sm:$0x3] %v130
    %139 = vst [vmem:[#allocation2 + $0x4] sm:$0x3] %v131
    %140 = vst [vmem:[#allocation2 + $0x6] sm:$0x3] %v132
    %141 = vst [vmem:[#allocation2 + $0x8] sm:$0x3] %v133
    %142 = vst [vmem:[#allocation2 + $0xa] sm:$0x3] %v134
    %143 = vst [vmem:[#allocation2 + $0xc] sm:$0x3] %v135
    %144 = vst [vmem:[#allocation2 + $0xe] sm:$0x3] %v136
    %v145 = vld [vmem:[#allocation7] sm:$0xff]
    %v146 = vld [vmem:[#allocation7 + $0x8] sm:$0xff]
    %v147 = vld [vmem:[#allocation7 + $0x10] sm:$0xff]
    %v148 = vld [vmem:[#allocation7 + $0x18] sm:$0xff]
    %v149 = vld [vmem:[#allocation4] sm:$0x3]
    %v150 = vld [vmem:[#allocation5] sm:$0x3]
    %v151 = vld [vmem:[#allocation2] sm:$0x3]
    %vm152 = vcmask 261120
    %v154 = vsel %vm152, %v149, 0
    %156 = vmatprep.subr.mxu0 0.0
    %157 = vmatpush1.msra.mxu0 0.0
    %158 = vmatprep.subr.mxu0 0.0
    %159 = vmatpush1.msra.mxu0 0.0
    %160 = vmatprep.subr.mxu0 0.0
    %161 = vmatpush1.msra.mxu0 0.0
    %162 = vmatprep.subr.mxu0 0.0
    %163 = vmatpush1.msra.mxu0 0.0
    %164 = vmatprep.subr.mxu0 0.0
    %165 = vmatpush1.msra.mxu0 0.0
    %166 = vmatprep.subr.mxu0 0.0
    %167 = vmatpush1.msra.mxu0 0.0
    %168 = vmatprep.subr.mxu0 0.0
    %169 = vmatpush1.msra.mxu0 0.0
    %170 = vmatprep.subr.mxu0 0.0
    %171 = vmatpush1.msra.mxu0 0.0
    %172 = vmatprep.subr.mxu0 0.0
    %173 = vmatpush1.msra.mxu0 0.0
    %174 = vmatprep.subr.mxu0 0.0
    %175 = vmatpush1.msra.mxu0 0.0
    %176 = vmatprep.subr.mxu0 0.0
    %177 = vmatpush1.msra.mxu0 0.0
    %178 = vmatprep.subr.mxu0 0.0
    %179 = vmatpush1.msra.mxu0 0.0
    %180 = vmatprep.subr.mxu0 0.0
    %181 = vmatpush1.msra.mxu0 %v148
    %182 = vmatprep.subr.mxu0 0.0
    %183 = vmatpush1.msra.mxu0 %v147
    %184 = vmatprep.subr.mxu0 0.0
    %185 = vmatpush1.msra.mxu0 %v146
    %186 = vmatprep.subr.mxu0 0.0
    %187 = vmatpush1.msra.mxu0 %v145
    %188 = vmatprep.subr.mxu0 0.0
    %189 = vmatpush2.msra.mxu0 0.0
    %190 = vmatprep.subr.mxu0 0.0
    %191 = vmatpush2.msra.mxu0 0.0
    %192 = vmatprep.subr.mxu0 0.0
    %193 = vmatpush2.msra.mxu0 0.0
    %194 = vmatprep.subr.mxu0 0.0
    %195 = vmatpush2.msra.mxu0 0.0
    %196 = vmatprep.subr.mxu0 0.0
    %197 = vmatpush2.msra.mxu0 0.0
    %198 = vmatprep.subr.mxu0 0.0
    %199 = vmatpush2.msra.mxu0 0.0
    %200 = vmatprep.subr.mxu0 0.0
    %201 = vmatpush2.msra.mxu0 0.0
    %202 = vmatprep.subr.mxu0 0.0
    %203 = vmatpush2.msra.mxu0 0.0
    %204 = vmatprep.subr.mxu0 0.0
    %205 = vmatpush2.msra.mxu0 0.0
    %206 = vmatprep.subr.mxu0 0.0
    %207 = vmatpush2.msra.mxu0 0.0
    %208 = vmatprep.subr.mxu0 0.0
    %209 = vmatpush2.msra.mxu0 0.0
    %210 = vmatprep.subr.mxu0 0.0
    %211 = vmatpush2.msra.mxu0 0.0
    %212 = vmatprep.subr.mxu0 0.0
    %213 = vmatpush2.msra.mxu0 0.0
    %214 = vmatprep.subr.mxu0 0.0
    %215 = vmatpush2.msra.mxu0 0.0
    %216 = vmatprep.subr.mxu0 0.0
    %217 = vmatpush2.msra.mxu0 0.0
    %218 = vmatprep.subr.mxu0 0.0
    %219 = vmatpush2.msra.mxu0 0.0
    %220 = vmatprep.mubr.f32.mxu0 0.0
    %221 = vmatmul.mubr.f32.gmra.mxu0 %v154
    %v222 = vpop.f32.mrf.mxu0
    %v223 = vadd.f32 0.0, %v222
    %v224 = vpop.f32.mrf.mxu0
    %225 = vdwg.mxu0
    %v226 = vadd.f32 %v151, %v223
    %v227 = vxor.u32 %v226, 2147483648
    %v228 = vmul.f32 %v227, 1.442695
    %v229 = vpow.pop %v228
    %v230 = vadd.f32 %v229, 1.0
    %v231 = vrcp.pop %v230
    %v232 = vmul.f32 1.0, %v231
    %v233 = vtanh.pop %v226
    %235 = vrot.lane.b32.xlu0 %v150, 32
    %v236 = vpop.permute.xlu0 %235
    %v238 = vmul.f32 %v232, %v236
    %240 = vrot.lane.b32.xlu0 %v233, 64
    %v241 = vpop.permute.xlu0 %240
    %v243 = vmul.f32 %v232, %v241
    %245 = vrot.lane.b32.xlu0 %v243, 32
    %v246 = vpop.permute.xlu0 %245
    %v248 = vadd.f32 %v238, %v246
    %v249 = vtanh.pop %v248
    %251 = vrot.lane.b32.xlu0 %v249, 64
    %v252 = vpop.permute.xlu0 %251
    %v254 = vmul.f32 %v232, %v252
    %256 = vrot.lane.b32.xlu0 %v254, 32
    %v257 = vpop.permute.xlu0 %256
    %vm259 = vcmask 254976
    %260 = vst.msk [vmem:[#allocation3] sm:$0x3] %vm259, %v257
    %s261 = scalar_lea.vmem [#allocation2], 2
    %v262 = vld [vmem:[%s261] sm:$0x3]
    %v263 = vsel %vm152, %v257, 0
    %265 = vmatprep.subr.mxu0 0.0
    %266 = vmatpush1.msra.mxu0 0.0
    %267 = vmatprep.subr.mxu0 0.0
    %268 = vmatpush1.msra.mxu0 0.0
    %269 = vmatprep.subr.mxu0 0.0
    %270 = vmatpush1.msra.mxu0 0.0
    %271 = vmatprep.subr.mxu0 0.0
    %272 = vmatpush1.msra.mxu0 0.0
    %273 = vmatprep.subr.mxu0 0.0
    %274 = vmatpush1.msra.mxu0 0.0
    %275 = vmatprep.subr.mxu0 0.0
    %276 = vmatpush1.msra.mxu0 0.0
    %277 = vmatprep.subr.mxu0 0.0
    %278 = vmatpush1.msra.mxu0 0.0
    %279 = vmatprep.subr.mxu0 0.0
    %280 = vmatpush1.msra.mxu0 0.0
    %281 = vmatprep.subr.mxu0 0.0
    %282 = vmatpush1.msra.mxu0 0.0
    %283 = vmatprep.subr.mxu0 0.0
    %284 = vmatpush1.msra.mxu0 0.0
    %285 = vmatprep.subr.mxu0 0.0
    %286 = vmatpush1.msra.mxu0 0.0
    %287 = vmatprep.subr.mxu0 0.0
    %288 = vmatpush1.msra.mxu0 0.0
    %289 = vmatprep.subr.mxu0 0.0
    %290 = vmatpush1.msra.mxu0 %v148
    %291 = vmatprep.subr.mxu0 0.0
    %292 = vmatpush1.msra.mxu0 %v147
    %293 = vmatprep.subr.mxu0 0.0
    %294 = vmatpush1.msra.mxu0 %v146
    %295 = vmatprep.subr.mxu0 0.0
    %296 = vmatpush1.msra.mxu0 %v145
    %297 = vmatprep.subr.mxu0 0.0
    %298 = vmatpush2.msra.mxu0 0.0
    %299 = vmatprep.subr.mxu0 0.0
    %300 = vmatpush2.msra.mxu0 0.0
    %301 = vmatprep.subr.mxu0 0.0
    %302 = vmatpush2.msra.mxu0 0.0
    %303 = vmatprep.subr.mxu0 0.0
    %304 = vmatpush2.msra.mxu0 0.0
    %305 = vmatprep.subr.mxu0 0.0
    %306 = vmatpush2.msra.mxu0 0.0
    %307 = vmatprep.subr.mxu0 0.0
    %308 = vmatpush2.msra.mxu0 0.0
    %309 = vmatprep.subr.mxu0 0.0
    %310 = vmatpush2.msra.mxu0 0.0
    %311 = vmatprep.subr.mxu0 0.0
    %312 = vmatpush2.msra.mxu0 0.0
    %313 = vmatprep.subr.mxu0 0.0
    %314 = vmatpush2.msra.mxu0 0.0
    %315 = vmatprep.subr.mxu0 0.0
    %316 = vmatpush2.msra.mxu0 0.0
    %317 = vmatprep.subr.mxu0 0.0
    %318 = vmatpush2.msra.mxu0 0.0
    %319 = vmatprep.subr.mxu0 0.0
    %320 = vmatpush2.msra.mxu0 0.0
    %321 = vmatprep.subr.mxu0 0.0
    %322 = vmatpush2.msra.mxu0 0.0
    %323 = vmatprep.subr.mxu0 0.0
    %324 = vmatpush2.msra.mxu0 0.0
    %325 = vmatprep.subr.mxu0 0.0
    %326 = vmatpush2.msra.mxu0 0.0
    %327 = vmatprep.subr.mxu0 0.0
    %328 = vmatpush2.msra.mxu0 0.0
    %329 = vmatprep.mubr.f32.mxu0 0.0
    %330 = vmatmul.mubr.f32.gmra.mxu0 %v263
    %v331 = vpop.f32.mrf.mxu0
    %v332 = vadd.f32 0.0, %v331
    %v333 = vpop.f32.mrf.mxu0
    %334 = vdwg.mxu0
    %v335 = vadd.f32 %v262, %v332
    %v336 = vxor.u32 %v335, 2147483648
    %v337 = vmul.f32 %v336, 1.442695
    %v338 = vpow.pop %v337
    %v339 = vadd.f32 %v338, 1.0
    %v340 = vrcp.pop %v339
    %v341 = vmul.f32 1.0, %v340
    %v342 = vtanh.pop %v335
    %v343 = vmul.f32 %v341, %v248
    %345 = vrot.lane.b32.xlu0 %v342, 64
    %v346 = vpop.permute.xlu0 %345
    %v348 = vmul.f32 %v341, %v346
    %350 = vrot.lane.b32.xlu0 %v348, 32
    %v351 = vpop.permute.xlu0 %350
    %v353 = vadd.f32 %v343, %v351
    %v354 = vtanh.pop %v353
    %356 = vrot.lane.b32.xlu0 %v354, 64
    %v357 = vpop.permute.xlu0 %356
    %v359 = vmul.f32 %v341, %v357
    %361 = vrot.lane.b32.xlu0 %v359, 32
    %v362 = vpop.permute.xlu0 %361
    %s364 = scalar_lea.vmem [#allocation3], 2
    %365 = vst.msk [vmem:[%s364] sm:$0x3] %vm259, %v362
    %s366 = scalar_lea.vmem [#allocation2], 4
    %v367 = vld [vmem:[%s366] sm:$0x3]
    %v368 = vsel %vm152, %v362, 0
    %370 = vmatprep.subr.mxu0 0.0
    %371 = vmatpush1.msra.mxu0 0.0
    %372 = vmatprep.subr.mxu0 0.0
    %373 = vmatpush1.msra.mxu0 0.0
    %374 = vmatprep.subr.mxu0 0.0
    %375 = vmatpush1.msra.mxu0 0.0
    %376 = vmatprep.subr.mxu0 0.0
    %377 = vmatpush1.msra.mxu0 0.0
    %378 = vmatprep.subr.mxu0 0.0
    %379 = vmatpush1.msra.mxu0 0.0
    %380 = vmatprep.subr.mxu0 0.0
    %381 = vmatpush1.msra.mxu0 0.0
    %382 = vmatprep.subr.mxu0 0.0
    %383 = vmatpush1.msra.mxu0 0.0
    %384 = vmatprep.subr.mxu0 0.0
    %385 = vmatpush1.msra.mxu0 0.0
    %386 = vmatprep.subr.mxu0 0.0
    %387 = vmatpush1.msra.mxu0 0.0
    %388 = vmatprep.subr.mxu0 0.0
    %389 = vmatpush1.msra.mxu0 0.0
    %390 = vmatprep.subr.mxu0 0.0
    %391 = vmatpush1.msra.mxu0 0.0
    %392 = vmatprep.subr.mxu0 0.0
    %393 = vmatpush1.msra.mxu0 0.0
    %394 = vmatprep.subr.mxu0 0.0
    %395 = vmatpush1.msra.mxu0 %v148
    %396 = vmatprep.subr.mxu0 0.0
    %397 = vmatpush1.msra.mxu0 %v147
    %398 = vmatprep.subr.mxu0 0.0
    %399 = vmatpush1.msra.mxu0 %v146
    %400 = vmatprep.subr.mxu0 0.0
    %401 = vmatpush1.msra.mxu0 %v145
    %402 = vmatprep.subr.mxu0 0.0
    %403 = vmatpush2.msra.mxu0 0.0
    %404 = vmatprep.subr.mxu0 0.0
    %405 = vmatpush2.msra.mxu0 0.0
    %406 = vmatprep.subr.mxu0 0.0
    %407 = vmatpush2.msra.mxu0 0.0
    %408 = vmatprep.subr.mxu0 0.0
    %409 = vmatpush2.msra.mxu0 0.0
    %410 = vmatprep.subr.mxu0 0.0
    %411 = vmatpush2.msra.mxu0 0.0
    %412 = vmatprep.subr.mxu0 0.0
    %413 = vmatpush2.msra.mxu0 0.0
    %414 = vmatprep.subr.mxu0 0.0
    %415 = vmatpush2.msra.mxu0 0.0
    %416 = vmatprep.subr.mxu0 0.0
    %417 = vmatpush2.msra.mxu0 0.0
    %418 = vmatprep.subr.mxu0 0.0
    %419 = vmatpush2.msra.mxu0 0.0
    %420 = vmatprep.subr.mxu0 0.0
    %421 = vmatpush2.msra.mxu0 0.0
    %422 = vmatprep.subr.mxu0 0.0
    %423 = vmatpush2.msra.mxu0 0.0
    %424 = vmatprep.subr.mxu0 0.0
    %425 = vmatpush2.msra.mxu0 0.0
    %426 = vmatprep.subr.mxu0 0.0
    %427 = vmatpush2.msra.mxu0 0.0
    %428 = vmatprep.subr.mxu0 0.0
    %429 = vmatpush2.msra.mxu0 0.0
    %430 = vmatprep.subr.mxu0 0.0
    %431 = vmatpush2.msra.mxu0 0.0
    %432 = vmatprep.subr.mxu0 0.0
    %433 = vmatpush2.msra.mxu0 0.0
    %434 = vmatprep.mubr.f32.mxu0 0.0
    %435 = vmatmul.mubr.f32.gmra.mxu0 %v368
    %v436 = vpop.f32.mrf.mxu0
    %v437 = vadd.f32 0.0, %v436
    %v438 = vpop.f32.mrf.mxu0
    %439 = vdwg.mxu0
    %v440 = vadd.f32 %v367, %v437
    %v441 = vxor.u32 %v440, 2147483648
    %v442 = vmul.f32 %v441, 1.442695
    %v443 = vpow.pop %v442
    %v444 = vadd.f32 %v443, 1.0
    %v445 = vrcp.pop %v444
    %v446 = vmul.f32 1.0, %v445
    %v447 = vtanh.pop %v440
    %v448 = vmul.f32 %v446, %v353
    %450 = vrot.lane.b32.xlu0 %v447, 64
    %v451 = vpop.permute.xlu0 %450
    %v453 = vmul.f32 %v446, %v451
    %455 = vrot.lane.b32.xlu0 %v453, 32
    %v456 = vpop.permute.xlu0 %455
    %v458 = vadd.f32 %v448, %v456
    %v459 = vtanh.pop %v458
    %461 = vrot.lane.b32.xlu0 %v459, 64
    %v462 = vpop.permute.xlu0 %461
    %v464 = vmul.f32 %v446, %v462
    %466 = vrot.lane.b32.xlu0 %v464, 32
    %v467 = vpop.permute.xlu0 %466
    %s469 = scalar_lea.vmem [#allocation3], 4
    %470 = vst.msk [vmem:[%s469] sm:$0x3] %vm259, %v467
    %s471 = scalar_lea.vmem [#allocation2], 6
    %v472 = vld [vmem:[%s471] sm:$0x3]
    %v473 = vsel %vm152, %v467, 0
    %475 = vmatprep.subr.mxu0 0.0
    %476 = vmatpush1.msra.mxu0 0.0
    %477 = vmatprep.subr.mxu0 0.0
    %478 = vmatpush1.msra.mxu0 0.0
    %479 = vmatprep.subr.mxu0 0.0
    %480 = vmatpush1.msra.mxu0 0.0
    %481 = vmatprep.subr.mxu0 0.0
    %482 = vmatpush1.msra.mxu0 0.0
    %483 = vmatprep.subr.mxu0 0.0
    %484 = vmatpush1.msra.mxu0 0.0
    %485 = vmatprep.subr.mxu0 0.0
    %486 = vmatpush1.msra.mxu0 0.0
    %487 = vmatprep.subr.mxu0 0.0
    %488 = vmatpush1.msra.mxu0 0.0
    %489 = vmatprep.subr.mxu0 0.0
    %490 = vmatpush1.msra.mxu0 0.0
    %491 = vmatprep.subr.mxu0 0.0
    %492 = vmatpush1.msra.mxu0 0.0
    %493 = vmatprep.subr.mxu0 0.0
    %494 = vmatpush1.msra.mxu0 0.0
    %495 = vmatprep.subr.mxu0 0.0
    %496 = vmatpush1.msra.mxu0 0.0
    %497 = vmatprep.subr.mxu0 0.0
    %498 = vmatpush1.msra.mxu0 0.0
    %499 = vmatprep.subr.mxu0 0.0
    %500 = vmatpush1.msra.mxu0 %v148
    %501 = vmatprep.subr.mxu0 0.0
    %502 = vmatpush1.msra.mxu0 %v147
    %503 = vmatprep.subr.mxu0 0.0
    %504 = vmatpush1.msra.mxu0 %v146
    %505 = vmatprep.subr.mxu0 0.0
    %506 = vmatpush1.msra.mxu0 %v145
    %507 = vmatprep.subr.mxu0 0.0
    %508 = vmatpush2.msra.mxu0 0.0
    %509 = vmatprep.subr.mxu0 0.0
    %510 = vmatpush2.msra.mxu0 0.0
    %511 = vmatprep.subr.mxu0 0.0
    %512 = vmatpush2.msra.mxu0 0.0
    %513 = vmatprep.subr.mxu0 0.0
    %514 = vmatpush2.msra.mxu0 0.0
    %515 = vmatprep.subr.mxu0 0.0
    %516 = vmatpush2.msra.mxu0 0.0
    %517 = vmatprep.subr.mxu0 0.0
    %518 = vmatpush2.msra.mxu0 0.0
    %519 = vmatprep.subr.mxu0 0.0
    %520 = vmatpush2.msra.mxu0 0.0
    %521 = vmatprep.subr.mxu0 0.0
    %522 = vmatpush2.msra.mxu0 0.0
    %523 = vmatprep.subr.mxu0 0.0
    %524 = vmatpush2.msra.mxu0 0.0
    %525 = vmatprep.subr.mxu0 0.0
    %526 = vmatpush2.msra.mxu0 0.0
    %527 = vmatprep.subr.mxu0 0.0
    %528 = vmatpush2.msra.mxu0 0.0
    %529 = vmatprep.subr.mxu0 0.0
    %530 = vmatpush2.msra.mxu0 0.0
    %531 = vmatprep.subr.mxu0 0.0
    %532 = vmatpush2.msra.mxu0 0.0
    %533 = vmatprep.subr.mxu0 0.0
    %534 = vmatpush2.msra.mxu0 0.0
    %535 = vmatprep.subr.mxu0 0.0
    %536 = vmatpush2.msra.mxu0 0.0
    %537 = vmatprep.subr.mxu0 0.0
    %538 = vmatpush2.msra.mxu0 0.0
    %539 = vmatprep.mubr.f32.mxu0 0.0
    %540 = vmatmul.mubr.f32.gmra.mxu0 %v473
    %v541 = vpop.f32.mrf.mxu0
    %v542 = vadd.f32 0.0, %v541
    %v543 = vpop.f32.mrf.mxu0
    %544 = vdwg.mxu0
    %v545 = vadd.f32 %v472, %v542
    %v546 = vxor.u32 %v545, 2147483648
    %v547 = vmul.f32 %v546, 1.442695
    %v548 = vpow.pop %v547
    %v549 = vadd.f32 %v548, 1.0
    %v550 = vrcp.pop %v549
    %v551 = vmul.f32 1.0, %v550
    %v552 = vtanh.pop %v545
    %v553 = vmul.f32 %v551, %v458
    %555 = vrot.lane.b32.xlu0 %v552, 64
    %v556 = vpop.permute.xlu0 %555
    %v558 = vmul.f32 %v551, %v556
    %560 = vrot.lane.b32.xlu0 %v558, 32
    %v561 = vpop.permute.xlu0 %560
    %v563 = vadd.f32 %v553, %v561
    %v564 = vtanh.pop %v563
    %566 = vrot.lane.b32.xlu0 %v564, 64
    %v567 = vpop.permute.xlu0 %566
    %v569 = vmul.f32 %v551, %v567
    %571 = vrot.lane.b32.xlu0 %v569, 32
    %v572 = vpop.permute.xlu0 %571
    %s574 = scalar_lea.vmem [#allocation3], 6
    %575 = vst.msk [vmem:[%s574] sm:$0x3] %vm259, %v572
    %s576 = scalar_lea.vmem [#allocation2], 8
    %v577 = vld [vmem:[%s576] sm:$0x3]
    %v578 = vsel %vm152, %v572, 0
    %580 = vmatprep.subr.mxu0 0.0
    %581 = vmatpush1.msra.mxu0 0.0
    %582 = vmatprep.subr.mxu0 0.0
    %583 = vmatpush1.msra.mxu0 0.0
    %584 = vmatprep.subr.mxu0 0.0
    %585 = vmatpush1.msra.mxu0 0.0
    %586 = vmatprep.subr.mxu0 0.0
    %587 = vmatpush1.msra.mxu0 0.0
    %588 = vmatprep.subr.mxu0 0.0
    %589 = vmatpush1.msra.mxu0 0.0
    %590 = vmatprep.subr.mxu0 0.0
    %591 = vmatpush1.msra.mxu0 0.0
    %592 = vmatprep.subr.mxu0 0.0
    %593 = vmatpush1.msra.mxu0 0.0
    %594 = vmatprep.subr.mxu0 0.0
    %595 = vmatpush1.msra.mxu0 0.0
    %596 = vmatprep.subr.mxu0 0.0
    %597 = vmatpush1.msra.mxu0 0.0
    %598 = vmatprep.subr.mxu0 0.0
    %599 = vmatpush1.msra.mxu0 0.0
    %600 = vmatprep.subr.mxu0 0.0
    %601 = vmatpush1.msra.mxu0 0.0
    %602 = vmatprep.subr.mxu0 0.0
    %603 = vmatpush1.msra.mxu0 0.0
    %604 = vmatprep.subr.mxu0 0.0
    %605 = vmatpush1.msra.mxu0 %v148
    %606 = vmatprep.subr.mxu0 0.0
    %607 = vmatpush1.msra.mxu0 %v147
    %608 = vmatprep.subr.mxu0 0.0
    %609 = vmatpush1.msra.mxu0 %v146
    %610 = vmatprep.subr.mxu0 0.0
    %611 = vmatpush1.msra.mxu0 %v145
    %612 = vmatprep.subr.mxu0 0.0
    %613 = vmatpush2.msra.mxu0 0.0
    %614 = vmatprep.subr.mxu0 0.0
    %615 = vmatpush2.msra.mxu0 0.0
    %616 = vmatprep.subr.mxu0 0.0
    %617 = vmatpush2.msra.mxu0 0.0
    %618 = vmatprep.subr.mxu0 0.0
    %619 = vmatpush2.msra.mxu0 0.0
    %620 = vmatprep.subr.mxu0 0.0
    %621 = vmatpush2.msra.mxu0 0.0
    %622 = vmatprep.subr.mxu0 0.0
    %623 = vmatpush2.msra.mxu0 0.0
    %624 = vmatprep.subr.mxu0 0.0
    %625 = vmatpush2.msra.mxu0 0.0
    %626 = vmatprep.subr.mxu0 0.0
    %627 = vmatpush2.msra.mxu0 0.0
    %628 = vmatprep.subr.mxu0 0.0
    %629 = vmatpush2.msra.mxu0 0.0
    %630 = vmatprep.subr.mxu0 0.0
    %631 = vmatpush2.msra.mxu0 0.0
    %632 = vmatprep.subr.mxu0 0.0
    %633 = vmatpush2.msra.mxu0 0.0
    %634 = vmatprep.subr.mxu0 0.0
    %635 = vmatpush2.msra.mxu0 0.0
    %636 = vmatprep.subr.mxu0 0.0
    %637 = vmatpush2.msra.mxu0 0.0
    %638 = vmatprep.subr.mxu0 0.0
    %639 = vmatpush2.msra.mxu0 0.0
    %640 = vmatprep.subr.mxu0 0.0
    %641 = vmatpush2.msra.mxu0 0.0
    %642 = vmatprep.subr.mxu0 0.0
    %643 = vmatpush2.msra.mxu0 0.0
    %644 = vmatprep.mubr.f32.mxu0 0.0
    %645 = vmatmul.mubr.f32.gmra.mxu0 %v578
    %v646 = vpop.f32.mrf.mxu0
    %v647 = vadd.f32 0.0, %v646
    %v648 = vpop.f32.mrf.mxu0
    %649 = vdwg.mxu0
    %v650 = vadd.f32 %v577, %v647
    %v651 = vxor.u32 %v650, 2147483648
    %v652 = vmul.f32 %v651, 1.442695
    %v653 = vpow.pop %v652
    %v654 = vadd.f32 %v653, 1.0
    %v655 = vrcp.pop %v654
    %v656 = vmul.f32 1.0, %v655
    %v657 = vtanh.pop %v650
    %v658 = vmul.f32 %v656, %v563
    %660 = vrot.lane.b32.xlu0 %v657, 64
    %v661 = vpop.permute.xlu0 %660
    %v663 = vmul.f32 %v656, %v661
    %665 = vrot.lane.b32.xlu0 %v663, 32
    %v666 = vpop.permute.xlu0 %665
    %v668 = vadd.f32 %v658, %v666
    %v669 = vtanh.pop %v668
    %671 = vrot.lane.b32.xlu0 %v669, 64
    %v672 = vpop.permute.xlu0 %671
    %v674 = vmul.f32 %v656, %v672
    %676 = vrot.lane.b32.xlu0 %v674, 32
    %v677 = vpop.permute.xlu0 %676
    %s679 = scalar_lea.vmem [#allocation3], 8
    %680 = vst.msk [vmem:[%s679] sm:$0x3] %vm259, %v677
    %s681 = scalar_lea.vmem [#allocation2], 10
    %v682 = vld [vmem:[%s681] sm:$0x3]
    %v683 = vsel %vm152, %v677, 0
    %685 = vmatprep.subr.mxu0 0.0
    %686 = vmatpush1.msra.mxu0 0.0
    %687 = vmatprep.subr.mxu0 0.0
    %688 = vmatpush1.msra.mxu0 0.0
    %689 = vmatprep.subr.mxu0 0.0
    %690 = vmatpush1.msra.mxu0 0.0
    %691 = vmatprep.subr.mxu0 0.0
    %692 = vmatpush1.msra.mxu0 0.0
    %693 = vmatprep.subr.mxu0 0.0
    %694 = vmatpush1.msra.mxu0 0.0
    %695 = vmatprep.subr.mxu0 0.0
    %696 = vmatpush1.msra.mxu0 0.0
    %697 = vmatprep.subr.mxu0 0.0
    %698 = vmatpush1.msra.mxu0 0.0
    %699 = vmatprep.subr.mxu0 0.0
    %700 = vmatpush1.msra.mxu0 0.0
    %701 = vmatprep.subr.mxu0 0.0
    %702 = vmatpush1.msra.mxu0 0.0
    %703 = vmatprep.subr.mxu0 0.0
    %704 = vmatpush1.msra.mxu0 0.0
    %705 = vmatprep.subr.mxu0 0.0
    %706 = vmatpush1.msra.mxu0 0.0
    %707 = vmatprep.subr.mxu0 0.0
    %708 = vmatpush1.msra.mxu0 0.0
    %709 = vmatprep.subr.mxu0 0.0
    %710 = vmatpush1.msra.mxu0 %v148
    %711 = vmatprep.subr.mxu0 0.0
    %712 = vmatpush1.msra.mxu0 %v147
    %713 = vmatprep.subr.mxu0 0.0
    %714 = vmatpush1.msra.mxu0 %v146
    %715 = vmatprep.subr.mxu0 0.0
    %716 = vmatpush1.msra.mxu0 %v145
    %717 = vmatprep.subr.mxu0 0.0
    %718 = vmatpush2.msra.mxu0 0.0
    %719 = vmatprep.subr.mxu0 0.0
    %720 = vmatpush2.msra.mxu0 0.0
    %721 = vmatprep.subr.mxu0 0.0
    %722 = vmatpush2.msra.mxu0 0.0
    %723 = vmatprep.subr.mxu0 0.0
    %724 = vmatpush2.msra.mxu0 0.0
    %725 = vmatprep.subr.mxu0 0.0
    %726 = vmatpush2.msra.mxu0 0.0
    %727 = vmatprep.subr.mxu0 0.0
    %728 = vmatpush2.msra.mxu0 0.0
    %729 = vmatprep.subr.mxu0 0.0
    %730 = vmatpush2.msra.mxu0 0.0
    %731 = vmatprep.subr.mxu0 0.0
    %732 = vmatpush2.msra.mxu0 0.0
    %733 = vmatprep.subr.mxu0 0.0
    %734 = vmatpush2.msra.mxu0 0.0
    %735 = vmatprep.subr.mxu0 0.0
    %736 = vmatpush2.msra.mxu0 0.0
    %737 = vmatprep.subr.mxu0 0.0
    %738 = vmatpush2.msra.mxu0 0.0
    %739 = vmatprep.subr.mxu0 0.0
    %740 = vmatpush2.msra.mxu0 0.0
    %741 = vmatprep.subr.mxu0 0.0
    %742 = vmatpush2.msra.mxu0 0.0
    %743 = vmatprep.subr.mxu0 0.0
    %744 = vmatpush2.msra.mxu0 0.0
    %745 = vmatprep.subr.mxu0 0.0
    %746 = vmatpush2.msra.mxu0 0.0
    %747 = vmatprep.subr.mxu0 0.0
    %748 = vmatpush2.msra.mxu0 0.0
    %749 = vmatprep.mubr.f32.mxu0 0.0
    %750 = vmatmul.mubr.f32.gmra.mxu0 %v683
    %v751 = vpop.f32.mrf.mxu0
    %v752 = vadd.f32 0.0, %v751
    %v753 = vpop.f32.mrf.mxu0
    %754 = vdwg.mxu0
    %v755 = vadd.f32 %v682, %v752
    %v756 = vxor.u32 %v755, 2147483648
    %v757 = vmul.f32 %v756, 1.442695
    %v758 = vpow.pop %v757
    %v759 = vadd.f32 %v758, 1.0
    %v760 = vrcp.pop %v759
    %v761 = vmul.f32 1.0, %v760
    %v762 = vtanh.pop %v755
    %v763 = vmul.f32 %v761, %v668
    %765 = vrot.lane.b32.xlu0 %v762, 64
    %v766 = vpop.permute.xlu0 %765
    %v768 = vmul.f32 %v761, %v766
    %770 = vrot.lane.b32.xlu0 %v768, 32
    %v771 = vpop.permute.xlu0 %770
    %v773 = vadd.f32 %v763, %v771
    %v774 = vtanh.pop %v773
    %776 = vrot.lane.b32.xlu0 %v774, 64
    %v777 = vpop.permute.xlu0 %776
    %v779 = vmul.f32 %v761, %v777
    %781 = vrot.lane.b32.xlu0 %v779, 32
    %v782 = vpop.permute.xlu0 %781
    %s784 = scalar_lea.vmem [#allocation3], 10
    %785 = vst.msk [vmem:[%s784] sm:$0x3] %vm259, %v782
    %s786 = scalar_lea.vmem [#allocation2], 12
    %v787 = vld [vmem:[%s786] sm:$0x3]
    %v788 = vsel %vm152, %v782, 0
    %790 = vmatprep.subr.mxu0 0.0
    %791 = vmatpush1.msra.mxu0 0.0
    %792 = vmatprep.subr.mxu0 0.0
    %793 = vmatpush1.msra.mxu0 0.0
    %794 = vmatprep.subr.mxu0 0.0
    %795 = vmatpush1.msra.mxu0 0.0
    %796 = vmatprep.subr.mxu0 0.0
    %797 = vmatpush1.msra.mxu0 0.0
    %798 = vmatprep.subr.mxu0 0.0
    %799 = vmatpush1.msra.mxu0 0.0
    %800 = vmatprep.subr.mxu0 0.0
    %801 = vmatpush1.msra.mxu0 0.0
    %802 = vmatprep.subr.mxu0 0.0
    %803 = vmatpush1.msra.mxu0 0.0
    %804 = vmatprep.subr.mxu0 0.0
    %805 = vmatpush1.msra.mxu0 0.0
    %806 = vmatprep.subr.mxu0 0.0
    %807 = vmatpush1.msra.mxu0 0.0
    %808 = vmatprep.subr.mxu0 0.0
    %809 = vmatpush1.msra.mxu0 0.0
    %810 = vmatprep.subr.mxu0 0.0
    %811 = vmatpush1.msra.mxu0 0.0
    %812 = vmatprep.subr.mxu0 0.0
    %813 = vmatpush1.msra.mxu0 0.0
    %814 = vmatprep.subr.mxu0 0.0
    %815 = vmatpush1.msra.mxu0 %v148
    %816 = vmatprep.subr.mxu0 0.0
    %817 = vmatpush1.msra.mxu0 %v147
    %818 = vmatprep.subr.mxu0 0.0
    %819 = vmatpush1.msra.mxu0 %v146
    %820 = vmatprep.subr.mxu0 0.0
    %821 = vmatpush1.msra.mxu0 %v145
    %822 = vmatprep.subr.mxu0 0.0
    %823 = vmatpush2.msra.mxu0 0.0
    %824 = vmatprep.subr.mxu0 0.0
    %825 = vmatpush2.msra.mxu0 0.0
    %826 = vmatprep.subr.mxu0 0.0
    %827 = vmatpush2.msra.mxu0 0.0
    %828 = vmatprep.subr.mxu0 0.0
    %829 = vmatpush2.msra.mxu0 0.0
    %830 = vmatprep.subr.mxu0 0.0
    %831 = vmatpush2.msra.mxu0 0.0
    %832 = vmatprep.subr.mxu0 0.0
    %833 = vmatpush2.msra.mxu0 0.0
    %834 = vmatprep.subr.mxu0 0.0
    %835 = vmatpush2.msra.mxu0 0.0
    %836 = vmatprep.subr.mxu0 0.0
    %837 = vmatpush2.msra.mxu0 0.0
    %838 = vmatprep.subr.mxu0 0.0
    %839 = vmatpush2.msra.mxu0 0.0
    %840 = vmatprep.subr.mxu0 0.0
    %841 = vmatpush2.msra.mxu0 0.0
    %842 = vmatprep.subr.mxu0 0.0
    %843 = vmatpush2.msra.mxu0 0.0
    %844 = vmatprep.subr.mxu0 0.0
    %845 = vmatpush2.msra.mxu0 0.0
    %846 = vmatprep.subr.mxu0 0.0
    %847 = vmatpush2.msra.mxu0 0.0
    %848 = vmatprep.subr.mxu0 0.0
    %849 = vmatpush2.msra.mxu0 0.0
    %850 = vmatprep.subr.mxu0 0.0
    %851 = vmatpush2.msra.mxu0 0.0
    %852 = vmatprep.subr.mxu0 0.0
    %853 = vmatpush2.msra.mxu0 0.0
    %854 = vmatprep.mubr.f32.mxu0 0.0
    %855 = vmatmul.mubr.f32.gmra.mxu0 %v788
    %v856 = vpop.f32.mrf.mxu0
    %v857 = vadd.f32 0.0, %v856
    %v858 = vpop.f32.mrf.mxu0
    %859 = vdwg.mxu0
    %v860 = vadd.f32 %v787, %v857
    %v861 = vxor.u32 %v860, 2147483648
    %v862 = vmul.f32 %v861, 1.442695
    %v863 = vpow.pop %v862
    %v864 = vadd.f32 %v863, 1.0
    %v865 = vrcp.pop %v864
    %v866 = vmul.f32 1.0, %v865
    %v867 = vtanh.pop %v860
    %v868 = vmul.f32 %v866, %v773
    %870 = vrot.lane.b32.xlu0 %v867, 64
    %v871 = vpop.permute.xlu0 %870
    %v873 = vmul.f32 %v866, %v871
    %875 = vrot.lane.b32.xlu0 %v873, 32
    %v876 = vpop.permute.xlu0 %875
    %v878 = vadd.f32 %v868, %v876
    %v879 = vtanh.pop %v878
    %881 = vrot.lane.b32.xlu0 %v879, 64
    %v882 = vpop.permute.xlu0 %881
    %v884 = vmul.f32 %v866, %v882
    %886 = vrot.lane.b32.xlu0 %v884, 32
    %v887 = vpop.permute.xlu0 %886
    %s889 = scalar_lea.vmem [#allocation3], 12
    %890 = vst.msk [vmem:[%s889] sm:$0x3] %vm259, %v887
    %s891 = scalar_lea.vmem [#allocation2], 14
    %v892 = vld [vmem:[%s891] sm:$0x3]
    %v893 = vsel %vm152, %v887, 0
    %895 = vmatprep.subr.mxu0 0.0
    %896 = vmatpush1.msra.mxu0 0.0
    %897 = vmatprep.subr.mxu0 0.0
    %898 = vmatpush1.msra.mxu0 0.0
    %899 = vmatprep.subr.mxu0 0.0
    %900 = vmatpush1.msra.mxu0 0.0
    %901 = vmatprep.subr.mxu0 0.0
    %902 = vmatpush1.msra.mxu0 0.0
    %903 = vmatprep.subr.mxu0 0.0
    %904 = vmatpush1.msra.mxu0 0.0
    %905 = vmatprep.subr.mxu0 0.0
    %906 = vmatpush1.msra.mxu0 0.0
    %907 = vmatprep.subr.mxu0 0.0
    %908 = vmatpush1.msra.mxu0 0.0
    %909 = vmatprep.subr.mxu0 0.0
    %910 = vmatpush1.msra.mxu0 0.0
    %911 = vmatprep.subr.mxu0 0.0
    %912 = vmatpush1.msra.mxu0 0.0
    %913 = vmatprep.subr.mxu0 0.0
    %914 = vmatpush1.msra.mxu0 0.0
    %915 = vmatprep.subr.mxu0 0.0
    %916 = vmatpush1.msra.mxu0 0.0
    %917 = vmatprep.subr.mxu0 0.0
    %918 = vmatpush1.msra.mxu0 0.0
    %919 = vmatprep.subr.mxu0 0.0
    %920 = vmatpush1.msra.mxu0 %v148
    %921 = vmatprep.subr.mxu0 0.0
    %922 = vmatpush1.msra.mxu0 %v147
    %923 = vmatprep.subr.mxu0 0.0
    %924 = vmatpush1.msra.mxu0 %v146
    %925 = vmatprep.subr.mxu0 0.0
    %926 = vmatpush1.msra.mxu0 %v145
    %927 = vmatprep.subr.mxu0 0.0
    %928 = vmatpush2.msra.mxu0 0.0
    %929 = vmatprep.subr.mxu0 0.0
    %930 = vmatpush2.msra.mxu0 0.0
    %931 = vmatprep.subr.mxu0 0.0
    %932 = vmatpush2.msra.mxu0 0.0
    %933 = vmatprep.subr.mxu0 0.0
    %934 = vmatpush2.msra.mxu0 0.0
    %935 = vmatprep.subr.mxu0 0.0
    %936 = vmatpush2.msra.mxu0 0.0
    %937 = vmatprep.subr.mxu0 0.0
    %938 = vmatpush2.msra.mxu0 0.0
    %939 = vmatprep.subr.mxu0 0.0
    %940 = vmatpush2.msra.mxu0 0.0
    %941 = vmatprep.subr.mxu0 0.0
    %942 = vmatpush2.msra.mxu0 0.0
    %943 = vmatprep.subr.mxu0 0.0
    %944 = vmatpush2.msra.mxu0 0.0
    %945 = vmatprep.subr.mxu0 0.0
    %946 = vmatpush2.msra.mxu0 0.0
    %947 = vmatprep.subr.mxu0 0.0
    %948 = vmatpush2.msra.mxu0 0.0
    %949 = vmatprep.subr.mxu0 0.0
    %950 = vmatpush2.msra.mxu0 0.0
    %951 = vmatprep.subr.mxu0 0.0
    %952 = vmatpush2.msra.mxu0 0.0
    %953 = vmatprep.subr.mxu0 0.0
    %954 = vmatpush2.msra.mxu0 0.0
    %955 = vmatprep.subr.mxu0 0.0
    %956 = vmatpush2.msra.mxu0 0.0
    %957 = vmatprep.subr.mxu0 0.0
    %958 = vmatpush2.msra.mxu0 0.0
    %959 = vmatprep.mubr.f32.mxu0 0.0
    %960 = vmatmul.mubr.f32.gmra.mxu0 %v893
    %v961 = vpop.f32.mrf.mxu0
    %v962 = vadd.f32 0.0, %v961
    %v963 = vpop.f32.mrf.mxu0
    %964 = vdwg.mxu0
    %v965 = vadd.f32 %v892, %v962
    %v966 = vxor.u32 %v965, 2147483648
    %v967 = vmul.f32 %v966, 1.442695
    %v968 = vpow.pop %v967
    %v969 = vadd.f32 %v968, 1.0
    %v970 = vrcp.pop %v969
    %v971 = vmul.f32 1.0, %v970
    %v972 = vtanh.pop %v965
    %v973 = vmul.f32 %v971, %v878
    %975 = vrot.lane.b32.xlu0 %v972, 64
    %v976 = vpop.permute.xlu0 %975
    %v978 = vmul.f32 %v971, %v976
    %980 = vrot.lane.b32.xlu0 %v978, 32
    %v981 = vpop.permute.xlu0 %980
    %v983 = vadd.f32 %v973, %v981
    %v984 = vtanh.pop %v983
    %986 = vrot.lane.b32.xlu0 %v984, 64
    %v987 = vpop.permute.xlu0 %986
    %v989 = vmul.f32 %v971, %v987
    %991 = vrot.lane.b32.xlu0 %v989, 32
    %v992 = vpop.permute.xlu0 %991
    %s994 = scalar_lea.vmem [#allocation3], 14
    %995 = vst.msk [vmem:[%s994] sm:$0x3] %vm259, %v992
    %996 = vst.msk [vmem:[#allocation4] sm:$0x3] %vm259, %v992
    %998 = vrot.lane.b32.xlu0 %v983, 96
    %v999 = vpop.permute.xlu0 %998
    %1001 = vst.msk [vmem:[#allocation5] sm:$0x3] %vm259, %v999
    %v1002 = vld [vmem:[%s4] sm:$0x1]
    %v1003 = vld [vmem:[#allocation6] sm:$0x1]
    %s1004 = vtos %v1003
    %v1005 = vld [vmem:[#allocation3] sm:$0x1]
    %v1006 = vld [vmem:[#allocation3 + $0x2] sm:$0x1]
    %v1007 = vld [vmem:[#allocation3 + $0x4] sm:$0x1]
    %v1008 = vld [vmem:[#allocation3 + $0x6] sm:$0x1]
    %v1009 = vld [vmem:[#allocation3 + $0x8] sm:$0x1]
    %v1010 = vld [vmem:[#allocation3 + $0xa] sm:$0x1]
    %v1011 = vld [vmem:[#allocation3 + $0xc] sm:$0x1]
    %v1012 = vld [vmem:[#allocation3 + $0xe] sm:$0x1]
    %v1021 = vrot.slane %v1006, 7
    %vm1022 = vcmask 1041409
    %v1023 = vsel %vm1022, %v1021, %v1005
    %v1024 = vrot.slane %v1007, 6
    %vm1025 = vcmask 1042434
    %v1026 = vsel %vm1025, %v1024, %v1023
    %v1027 = vrot.slane %v1008, 5
    %vm1028 = vcmask 1043459
    %v1029 = vsel %vm1028, %v1027, %v1026
    %v1030 = vrot.slane %v1009, 4
    %vm1031 = vcmask 1044484
    %v1032 = vsel %vm1031, %v1030, %v1029
    %v1033 = vrot.slane %v1010, 3
    %vm1034 = vcmask 1045509
    %v1035 = vsel %vm1034, %v1033, %v1032
    %v1036 = vrot.slane %v1011, 2
    %vm1037 = vcmask 1046534
    %v1038 = vsel %vm1037, %v1036, %v1035
    %v1039 = vrot.slane %v1012, 1
    %vm1040 = vcmask 1047559
    %v1041 = vsel %vm1040, %v1039, %v1038
    %1043 = vst.msk [vmem:[#allocation11] sm:$0xff] %vm152, %v1041
    %v1045 = vlaneseq
    %v1046 = vshrl.u32 %v1045, 7
    %v1047 = vsub.s32 0, %v1046
    %v1048 = vrot.slane %v1002, %v1047
    %v1050 = vmul.f32 %v1005, %v1048
    %v1051 = vmul.f32 %v1006, %v1048
    %v1052 = vmul.f32 %v1007, %v1048
    %v1053 = vmul.f32 %v1008, %v1048
    %v1054 = vmul.f32 %v1009, %v1048
    %v1055 = vmul.f32 %v1010, %v1048
    %v1056 = vmul.f32 %v1011, %v1048
    %v1057 = vmul.f32 %v1012, %v1048
    %v1066 = vrot.slane %v1051, 7
    %v1067 = vsel %vm1022, %v1066, %v1050
    %v1068 = vrot.slane %v1052, 6
    %v1069 = vsel %vm1025, %v1068, %v1067
    %v1070 = vrot.slane %v1053, 5
    %v1071 = vsel %vm1028, %v1070, %v1069
    %v1072 = vrot.slane %v1054, 4
    %v1073 = vsel %vm1031, %v1072, %v1071
    %v1074 = vrot.slane %v1055, 3
    %v1075 = vsel %vm1034, %v1074, %v1073
    %v1076 = vrot.slane %v1056, 2
    %v1077 = vsel %vm1037, %v1076, %v1075
    %v1078 = vrot.slane %v1057, 1
    %v1079 = vsel %vm1040, %v1078, %v1077
    %v1081 = vsel %vm152, %v1079, 0.0
    %1082 = vadd.xlane.f32.xlu0 %v1081
    %v1083 = vpop.xlane.xlu0 %1082
    %v1084 = vstv %s1004
    %v1085 = vadd.f32 %v1083, %v1084
    %v1086 = vld [vmem:[%s0] sm:$0xff]
    %v1087 = vadd.f32 %v1085, %v1086
    %1089 = vset.pattern.permute.xlu0 0
    %1090 = vperm.xlu0 %1089, %v1087
    %v1091 = vpop.permute.xlu0 %1090
    %v1092 = vlaneseq
    %v1093 = vand.u32 %v1092, 127
    %v1094 = vlaneseq
    %v1095 = vshrl.u32 %v1094, 7
    %v1096 = vsub.s32 %v1093, %v1095
    %v1097 = vrot.slane %v1091, %v1096
    %vm1099 = vcmask 57344
    %1100 = vst.msk [vmem:[#allocation10] sm:$0x1] %vm1099, %v1097
    %v1101 = vld [vmem:[#allocation3 + $0x1] sm:$0x1]
    %v1102 = vld [vmem:[#allocation3 + $0x3] sm:$0x1]
    %v1103 = vld [vmem:[#allocation3 + $0x5] sm:$0x1]
    %v1104 = vld [vmem:[#allocation3 + $0x7] sm:$0x1]
    %v1105 = vld [vmem:[#allocation3 + $0x9] sm:$0x1]
    %v1106 = vld [vmem:[#allocation3 + $0xb] sm:$0x1]
    %v1107 = vld [vmem:[#allocation3 + $0xd] sm:$0x1]
    %v1108 = vld [vmem:[#allocation3 + $0xf] sm:$0x1]
    %v1117 = vrot.slane %v1102, 7
    %v1118 = vsel %vm1022, %v1117, %v1101
    %v1119 = vrot.slane %v1103, 6
    %v1120 = vsel %vm1025, %v1119, %v1118
    %v1121 = vrot.slane %v1104, 5
    %v1122 = vsel %vm1028, %v1121, %v1120
    %v1123 = vrot.slane %v1105, 4
    %v1124 = vsel %vm1031, %v1123, %v1122
    %v1125 = vrot.slane %v1106, 3
    %v1126 = vsel %vm1034, %v1125, %v1124
    %v1127 = vrot.slane %v1107, 2
    %v1128 = vsel %vm1037, %v1127, %v1126
    %v1129 = vrot.slane %v1108, 1
    %v1130 = vsel %vm1040, %v1129, %v1128
    %s1132 = scalar_lea.vmem [#allocation11], 8
    %1133 = vst.msk [vmem:[%s1132] sm:$0xff] %vm152, %v1130
    %v1134 = vmul.f32 %v1101, %v1048
    %v1135 = vmul.f32 %v1102, %v1048
    %v1136 = vmul.f32 %v1103, %v1048
    %v1137 = vmul.f32 %v1104, %v1048
    %v1138 = vmul.f32 %v1105, %v1048
    %v1139 = vmul.f32 %v1106, %v1048
    %v1140 = vmul.f32 %v1107, %v1048
    %v1141 = vmul.f32 %v1108, %v1048
    %v1150 = vrot.slane %v1135, 7
    %v1151 = vsel %vm1022, %v1150, %v1134
    %v1152 = vrot.slane %v1136, 6
    %v1153 = vsel %vm1025, %v1152, %v1151
    %v1154 = vrot.slane %v1137, 5
    %v1155 = vsel %vm1028, %v1154, %v1153
    %v1156 = vrot.slane %v1138, 4
    %v1157 = vsel %vm1031, %v1156, %v1155
    %v1158 = vrot.slane %v1139, 3
    %v1159 = vsel %vm1034, %v1158, %v1157
    %v1160 = vrot.slane %v1140, 2
    %v1161 = vsel %vm1037, %v1160, %v1159
    %v1162 = vrot.slane %v1141, 1
    %v1163 = vsel %vm1040, %v1162, %v1161
    %v1165 = vsel %vm152, %v1163, 0.0
    %1166 = vadd.xlane.f32.xlu0 %v1165
    %v1167 = vpop.xlane.xlu0 %1166
    %v1168 = vadd.f32 %v1167, %v1084
    %v1169 = vld [vmem:[%s0] sm:$0xff]
    %v1170 = vadd.f32 %v1168, %v1169
    %1172 = vset.pattern.permute.xlu0 1
    %1173 = vperm.xlu0 %1172, %v1170
    %v1174 = vpop.permute.xlu0 %1173
    %v1175 = vlaneseq
    %v1176 = vshrl.u32 %v1175, 7
    %v1177 = vsub.s32 %v1093, %v1176
    %v1178 = vrot.slane %v1174, %v1177
    %1180 = vst.msk [vmem:[#allocation10 + $0x1] sm:$0x1] %vm1099, %v1178
    // Predicated region
    $region34: #{audio_rnn_forward.1} parent=1 // pred_check
      _
    $region35: #{audio_rnn_forward.1} parent=1 // pred_check_branch
      %1182 = sbr.rel (0) target = $region37
    $region36: #{audio_rnn_forward.1} parent=1 // pred_region
      %s1184 = ssub.s32 32, 32
      %1185 = vsyncadd [#allocation9], %s1184
      %s1187 = sshll.u32 [#allocation10], 4
      %s1188 = int_to_ptr.vmem [resolvable:$true] %s1187
      %1190 = dma.vmem_to_hbm [thread:$0]  %s1188, 32, %s6, [#allocation9]
    $region37: #{audio_rnn_forward.1} parent=1 // pred_fallthru
      _
    // Predicated region
    $region38: #{audio_rnn_forward.1} parent=1 // pred_check
      _
    $region39: #{audio_rnn_forward.1} parent=1 // pred_check_branch
      %1192 = sbr.rel (0) target = $region41
    $region40: #{audio_rnn_forward.1} parent=1 // pred_region
      %s1194 = ssub.s32 256, 256
      %1195 = vsyncadd [#allocation12], %s1194
      %s1196 = sshll.u32 [#allocation11], 4
      %s1197 = int_to_ptr.vmem [resolvable:$true] %s1196
      %1202 = dma.vmem_to_hbm [thread:$0]  %s1197, 256, %s7, [#allocation12], 128, 128, 8
    $region41: #{audio_rnn_forward.1} parent=1 // pred_fallthru
      _
    // Predicated region
    $region42: #{audio_rnn_forward.1} parent=1 // pred_check
      _
    $region43: #{audio_rnn_forward.1} parent=1 // pred_check_branch
      %1204 = sbr.rel (0) target = $region45
    $region44: #{audio_rnn_forward.1} parent=1 // pred_region
      %1205 = dma.done [#allocation9], 32
    $region45: #{audio_rnn_forward.1} parent=1 // pred_fallthru
      _
    // Predicated region
    $region46: #{audio_rnn_forward.1} parent=1 // pred_check
      _
    $region47: #{audio_rnn_forward.1} parent=1 // pred_check_branch
      %1207 = sbr.rel (0) target = $region49
    $region48: #{audio_rnn_forward.1} parent=1 // pred_region
      %1208 = dma.done [#allocation12], 256
    $region49: #{audio_rnn_forward.1} parent=1 // pred_fallthru
      _
    %1209 = vsyncpa [#allocation8], 1
    %1210 = vsyncpa [#allocation9], 1
    %1211 = vsyncpa [#allocation12], 1

</llo_original>
